<compile_context>
chip_gen: v7x
topology: tpu7x:2x2x1
jax: 0.10.0
libtpu: 0.0.40
codegen_flags: <defaults>
</compile_context>

<pallas_src>
import functools

import jax
import jax.numpy as jnp
import numpy as np
from jax.experimental import pallas as pl
from jax.experimental.pallas import tpu as pltpu


# -----------------------------------------------------------------------------
# Pallas kernel: conv/LayerNorm stack for one sample.
# -----------------------------------------------------------------------------
def _postprocess_kernel(
    img_ref, wc1_ref, w2a_ref, wc3_ref, wc4_ref, wc5_ref, wc6_ref, gb_ref,
    out_ref,
    y_ref,                        # bf16 VMEM scratch [ndf, N]: live activation between layers
    *, inv_n, ew_dtype,
):
    f32 = jnp.float32
    bf16 = jnp.bfloat16

    def leaky(x):                 # LeakyReLU(0.01), dtype-preserving
        return jnp.maximum(x, 0.01 * x)

    def moments(t):               # single-pass mean / var over the spatial axis (f32)
        s1 = jnp.sum(t, axis=-1, keepdims=True)
        s2 = jnp.sum(t * t, axis=-1, keepdims=True)
        mean = s1 * inv_n
        var = jnp.maximum(s2 * inv_n - mean * mean, 0.0)   # clamp cancellation
        return mean, var

    def affine_leaky(xn, row):
        # xn: normalized activation in ew_dtype; gamma/beta rows are [1, N] in ew_dtype.
        g = gb_ref[row:row + 1, :]
        b = gb_ref[row + 4:row + 5, :]
        return leaky(xn * g + b)

    img = img_ref[0]                                       # [1, N] f32

    # --- conv1 + LN1, analytically ------------------------------------------
    # conv1 row i = wc1[i] * img  =>  mean_i = wc1[i]*mean(img), var_i = wc1[i]^2*var(img)
    # so (x_i - mean_i)*rstd_i = (wc1[i]*rsqrt(wc1[i]^2*var_img + eps)) * (img - mean(img)).
    m_img, v_img = moments(img)                            # [1, 1] each
    w1 = wc1_ref[...]                                      # [ndf, 1] f32
    a1 = w1 * jax.lax.rsqrt(w1 * w1 * v_img + 1e-5)        # [ndf, 1] f32 (exact per-channel rstd)
    imgc = (img - m_img).astype(ew_dtype)                  # [1, N]
    xn1 = a1.astype(ew_dtype) * imgc                       # [ndf, N] outer product (VPU)
    y_ref[...] = affine_leaky(xn1, 0).astype(bf16)

    # --- conv{2,3,4} + LN + LeakyReLU ----------------------------------------
    def conv_ln(w_ref, row):
        t = jnp.dot(w_ref[...], y_ref[...], preferred_element_type=f32)   # [ndf, N] f32
        mean, var = moments(t)                                            # stats on the value
        rstd = jax.lax.rsqrt(var + 1e-5)
        xn = ((t - mean) * rstd).astype(ew_dtype)          # normalize in f32, then narrow
        y_ref[...] = affine_leaky(xn, row).astype(bf16)

    conv_ln(w2a_ref, 1)   # conv2: econd half is exactly cancelled by LN2's mean subtraction
    conv_ln(wc3_ref, 2)
    conv_ln(wc4_ref, 3)

    # --- conv5 (no LN) + LeakyReLU, conv6 on the MXU, final ReLU --------------
    t5 = jnp.dot(wc5_ref[...], y_ref[...], preferred_element_type=f32)    # [ndf, N] f32
    y5 = leaky(t5.astype(ew_dtype)).astype(bf16)                          # [ndf, N] bf16
    o = jnp.dot(wc6_ref[...], y5, preferred_element_type=f32)             # [8, N] (rows 1..7 zero)
    out_ref[0] = jnp.maximum(o[0:1, :], 0.0)                              # [1, N] f32


# -----------------------------------------------------------------------------
# Helpers
# -----------------------------------------------------------------------------
def _default_elementwise_dtype():
    """bf16 elementwise on chips with a bf16 VPU (v6e / v7x); f32 on v5e and older."""
    try:
        kind = jax.devices()[0].device_kind.lower()
    except Exception:
        return jnp.bfloat16
    if any(tag in kind for tag in ("v2", "v3", "v4", "v5")):
        return jnp.float32
    return jnp.bfloat16


def _vmem_limit_bytes(ndf, n):
    """Explicit VMEM budget from what the kernel actually allocates, + headroom."""
    est = (
        2 * ndf * n * 4                                   # two live f32 [ndf, N] temporaries
        + ndf * n * 2                                     # bf16 activation scratch
        + ndf * n * 2                                     # bf16 leaky(conv5) operand for conv6
        + 8 * n * 4                                       # packed LN gamma/beta (f32 upper bound)
        + 2 * (4 * ndf * ndf * 2 + 8 * ndf * 2 + ndf * 4)  # double-buffered weights
        + 2 * 2 * n * 4                                   # double-buffered [1, N] img / out
    )
    est = est + est // 4 + (8 << 20)                      # +25% + 8 MiB Mosaic-internal headroom
    try:
        cap = int(pltpu.get_tpu_info().vmem_capacity_bytes)
    except Exception:
        cap = 64 << 20                                    # conservative: v7x per-core VMEM
    return int(max(32 << 20, min(est, int(0.9 * cap))))


# -----------------------------------------------------------------------------
# Wrapper
# -----------------------------------------------------------------------------
def postprocess_forward(img, e_true, params, isize, ndf):
    """img: [B, 1, S, S, S] float32, e_true: [B, 1] float32 (unused, see below)."""
    # NOTE: the fcec1-3 energy-conditioning MLP and conv2's econd columns produce
    # a per-(sample, channel) constant over the spatial dims, which LayerNorm
    # bnco2 (normalizing over the spatial dims only) cancels exactly, so the
    # econd path has zero effect on the module output and is omitted here.
    del e_true

    S = isize
    N = S * S * S
    B = img.shape[0]
    f32 = jnp.float32
    bf16 = jnp.bfloat16
    ew_dtype = _default_elementwise_dtype()

    img_flat = img.reshape(B, 1, N).astype(f32)

    # Pack the LN affines into one sublane-dense [8, N] buffer (rows 0-3: gamma, 4-7: beta).
    gb = jnp.concatenate(
        [params["g1"], params["g2"], params["g3"], params["g4"],
         params["be1"], params["be2"], params["be3"], params["be4"]],
        axis=0).astype(ew_dtype)                                         # [8, N]

    # Weights: bf16 operands for the MXU matmuls, f32 for the analytic conv1/LN1 column.
    wc1 = params["wc1"].astype(f32)                                      # [ndf, 1]
    w2a = params["w2a"].astype(bf16)                                     # [ndf, ndf]
    wc3 = params["wc3"].astype(bf16)
    wc4 = params["wc4"].astype(bf16)
    wc5 = params["wc5"].astype(bf16)
    wc6p = jnp.pad(params["wc6"], ((0, 7), (0, 0))).astype(bf16)         # [8, ndf], row 0 real

    weight_inputs = (wc1, w2a, wc3, wc4, wc5, wc6p, gb)

    in_specs = [pl.BlockSpec((1, 1, N), lambda b: (b, 0, 0))]            # img (per sample)
    in_specs += [pl.BlockSpec(w.shape, lambda b: (0, 0)) for w in weight_inputs]

    kernel = functools.partial(_postprocess_kernel, inv_n=1.0 / N, ew_dtype=ew_dtype)

    # TODO(synk): for tiny configs (N << 8k) multiple samples could be packed per
    # grid step to amortize the ~0.35 us/step overhead and keep stores lane-dense;
    # the production shape (ndf=128, S=30) is unaffected, so this is skipped.
    out = pl.pallas_call(
        kernel,
        out_shape=jax.ShapeDtypeStruct((B, 1, N), f32),
        grid=(B,),
        in_specs=in_specs,
        out_specs=pl.BlockSpec((1, 1, N), lambda b: (b, 0, 0)),
        scratch_shapes=[pltpu.VMEM((ndf, N), bf16)],
        compiler_params=pltpu.CompilerParams(
            dimension_semantics=("parallel",),
            vmem_limit_bytes=_vmem_limit_bytes(ndf, N),
        ),
    )(img_flat, *weight_inputs)

    return out.reshape(B, 1, S, S, S)


# -----------------------------------------------------------------------------
# Deterministic parameter init (synthetic, matches the module's __init__ shapes)
# -----------------------------------------------------------------------------
def make_params(key, isize, ndf):
    S = isize
    N = S * S * S
    nh = ndf // 2
    ks = jax.random.split(key, 21)

    def rn(k, shape, scale=0.1):
        return (scale * jax.random.normal(k, shape)).astype(jnp.float32)

    return {
        # fcec1/2/3 (torch.nn.Linear layout [out, in]; 1-D bias) — reference only.
        "w1": rn(ks[0], (nh, 2)),   "b1": rn(ks[1], (nh,)),
        "w2": rn(ks[2], (nh, nh)),  "b2": rn(ks[3], (nh,)),
        "w3": rn(ks[4], (nh, nh)),  "b3": rn(ks[5], (nh,)),
        # conv1: Conv3d(1, ndf, 1, bias=False) -> [ndf, 1]
        "wc1": rn(ks[6], (ndf, 1)),
        "g1": 1.0 + rn(ks[7], (1, N), 0.05), "be1": rn(ks[8], (1, N), 0.05),
        # conv2: Conv3d(ndf + nh, ndf, 1) split into image part / econd part
        "w2a": rn(ks[9], (ndf, ndf)), "w2b": rn(ks[10], (ndf, nh)),
        "g2": 1.0 + rn(ks[11], (1, N), 0.05), "be2": rn(ks[12], (1, N), 0.05),
        "wc3": rn(ks[13], (ndf, ndf)),
        "g3": 1.0 + rn(ks[14], (1, N), 0.05), "be3": rn(ks[15], (1, N), 0.05),
        "wc4": rn(ks[16], (ndf, ndf)),
        "g4": 1.0 + rn(ks[17], (1, N), 0.05), "be4": rn(ks[18], (1, N), 0.05),
        "wc5": rn(ks[19], (ndf, ndf)),
        "wc6": rn(ks[20], (1, ndf)),
    }


# -----------------------------------------------------------------------------
# Pure-JAX f32 reference (mirrors the PyTorch NCDHW semantics), INCLUDING the
# full econd path — validates that dropping it in the kernel is exact.
# -----------------------------------------------------------------------------
def reference_forward(img, e_true, p, isize, ndf):
    S = isize
    nh = ndf // 2
    B = img.shape[0]
    lk = lambda v: jnp.where(v >= 0, v, 0.01 * v)

    x = img.reshape(B, 1, S, S, S).astype(jnp.float32)
    esum = jnp.sum(x.reshape(B, -1), axis=1, keepdims=True)
    econd = jnp.concatenate([esum, e_true.reshape(B, 1).astype(jnp.float32)], axis=1)
    h = lk(econd @ p["w1"].T + p["b1"])
    h = lk(h @ p["w2"].T + p["b2"])
    h = lk(h @ p["w3"].T + p["b3"])                                      # [B, nh]
    econd_map = jnp.broadcast_to(h[:, :, None, None, None], (B, nh, S, S, S))

    def conv1x1(y, w):  # w: [Cout, Cin]
        return jnp.einsum("oc,bcxyz->boxyz", w, y)

    def ln(y, g, b):
        g3 = g.reshape(S, S, S)
        b3 = b.reshape(S, S, S)
        mean = jnp.mean(y, axis=(2, 3, 4), keepdims=True)
        var = jnp.mean((y - mean) ** 2, axis=(2, 3, 4), keepdims=True)
        return (y - mean) / jnp.sqrt(var + 1e-5) * g3 + b3

    y = lk(ln(conv1x1(x, p["wc1"]), p["g1"], p["be1"]))
    y = jnp.concatenate([y, econd_map], axis=1)
    wc2 = jnp.concatenate([p["w2a"], p["w2b"]], axis=1)
    y = lk(ln(conv1x1(y, wc2), p["g2"], p["be2"]))
    y = lk(ln(conv1x1(y, p["wc3"]), p["g3"], p["be3"]))
    y = lk(ln(conv1x1(y, p["wc4"]), p["g4"], p["be4"]))
    y = lk(conv1x1(y, p["wc5"]))
    y = conv1x1(y, p["wc6"])
    return jax.nn.relu(y)


# -----------------------------------------------------------------------------
if __name__ == "__main__":
    ISIZE = 8     # small spatial size (module default 30)
    NDF = 32      # small channel width (module default 128)
    BATCH = 2

    key = jax.random.PRNGKey(0)
    kp, ki, ke = jax.random.split(key, 3)

    params = make_params(kp, ISIZE, NDF)
    img = jax.random.normal(ki, (BATCH, 1, ISIZE, ISIZE, ISIZE), jnp.float32)
    e_true = jax.random.uniform(ke, (BATCH, 1), jnp.float32, 0.5, 2.0)

    out = jax.block_until_ready(postprocess_forward(img, e_true, params, ISIZE, NDF))
    ref = jax.block_until_ready(reference_forward(img, e_true, params, ISIZE, NDF))

    assert out.shape == (BATCH, 1, ISIZE, ISIZE, ISIZE)
    # bf16 MXU operands + bf16 LN affine/leaky (on v6e/v7x) vs. a pure-f32
    # reference; LN statistics and normalization stay in f32.
    np.testing.assert_allclose(np.asarray(out), np.asarray(ref), rtol=5e-2, atol=5e-2)

    print("KERNEL_OK")
</pallas_src>

<mosaic_0001>
module attributes {stable_mosaic.version = 11 : i64} {
  func.func @_postprocess_kernel(%arg0: i32, %arg1: memref<1x1x512xf32, #tpu.memory_space<vmem>>, %arg2: memref<32x1xf32, #tpu.memory_space<vmem>>, %arg3: memref<32x32xbf16, #tpu.memory_space<vmem>>, %arg4: memref<32x32xbf16, #tpu.memory_space<vmem>>, %arg5: memref<32x32xbf16, #tpu.memory_space<vmem>>, %arg6: memref<32x32xbf16, #tpu.memory_space<vmem>>, %arg7: memref<8x32xbf16, #tpu.memory_space<vmem>>, %arg8: memref<8x512xbf16, #tpu.memory_space<vmem>>, %arg9: memref<1x1x512xf32, #tpu.memory_space<vmem>>, %arg10: memref<32x512xbf16, #tpu.memory_space<vmem>>) attributes {dimension_semantics = [#tpu.dimension_semantics<parallel>], iteration_bounds = array<i64: 2>, scalar_prefetch = 0 : i64, scratch_operands = 1 : i64, tpu.core_type = #tpu.core_type<tc>, window_params = [{transform_indices = @transform_0, window_bounds = array<i64: 1, 1, 512>}, {pipeline_mode = #tpu.pipeline_mode<synchronous>, transform_indices = @transform_1, window_bounds = array<i64: 32, 1>}, {pipeline_mode = #tpu.pipeline_mode<synchronous>, transform_indices = @transform_2, window_bounds = array<i64: 32, 32>}, {pipeline_mode = #tpu.pipeline_mode<synchronous>, transform_indices = @transform_3, window_bounds = array<i64: 32, 32>}, {pipeline_mode = #tpu.pipeline_mode<synchronous>, transform_indices = @transform_4, window_bounds = array<i64: 32, 32>}, {pipeline_mode = #tpu.pipeline_mode<synchronous>, transform_indices = @transform_5, window_bounds = array<i64: 32, 32>}, {pipeline_mode = #tpu.pipeline_mode<synchronous>, transform_indices = @transform_6, window_bounds = array<i64: 8, 32>}, {pipeline_mode = #tpu.pipeline_mode<synchronous>, transform_indices = @transform_7, window_bounds = array<i64: 8, 512>}, {transform_indices = @transform_8, window_bounds = array<i64: 1, 1, 512>}]} {
    %c0 = arith.constant 0 : index
    %c0_0 = arith.constant 0 : index
    %c0_1 = arith.constant 0 : index
    %0 = vector.load %arg1[%c0, %c0_0, %c0_1] : memref<1x1x512xf32, #tpu.memory_space<vmem>>, vector<1x1x512xf32>
    %1 = vector.shape_cast %0 : vector<1x1x512xf32> to vector<1x512xf32>
    %cst = arith.constant dense<0.000000e+00> : vector<1xf32>
    %2 = vector.multi_reduction <add>, %1, %cst [1] : vector<1x512xf32> to vector<1xf32>
    %3 = vector.shape_cast %2 : vector<1xf32> to vector<1x1xf32>
    %4 = arith.mulf %1, %1 : vector<1x512xf32>
    %cst_2 = arith.constant dense<0.000000e+00> : vector<1xf32>
    %5 = vector.multi_reduction <add>, %4, %cst_2 [1] : vector<1x512xf32> to vector<1xf32>
    %6 = vector.shape_cast %5 : vector<1xf32> to vector<1x1xf32>
    %cst_3 = arith.constant 0.001953125 : f32
    %7 = vector.broadcast %cst_3 : f32 to vector<1x1xf32>
    %8 = arith.mulf %3, %7 : vector<1x1xf32>
    %cst_4 = arith.constant 0.001953125 : f32
    %9 = vector.broadcast %cst_4 : f32 to vector<1x1xf32>
    %10 = arith.mulf %6, %9 : vector<1x1xf32>
    %11 = arith.mulf %8, %8 : vector<1x1xf32>
    %12 = arith.subf %10, %11 : vector<1x1xf32>
    %cst_5 = arith.constant 0.000000e+00 : f32
    %13 = vector.broadcast %cst_5 : f32 to vector<1x1xf32>
    %14 = arith.maximumf %12, %13 : vector<1x1xf32>
    %c0_6 = arith.constant 0 : index
    %c0_7 = arith.constant 0 : index
    %15 = vector.load %arg2[%c0_6, %c0_7] : memref<32x1xf32, #tpu.memory_space<vmem>>, vector<32x1xf32>
    %16 = arith.mulf %15, %15 : vector<32x1xf32>
    %17 = vector.broadcast %14 : vector<1x1xf32> to vector<32x1xf32>
    %18 = arith.mulf %16, %17 : vector<32x1xf32>
    %cst_8 = arith.constant 9.99999974E-6 : f32
    %19 = vector.broadcast %cst_8 : f32 to vector<32x1xf32>
    %20 = arith.addf %18, %19 : vector<32x1xf32>
    %21 = math.rsqrt %20 : vector<32x1xf32>
    %22 = arith.mulf %15, %21 : vector<32x1xf32>
    %23 = vector.broadcast %8 : vector<1x1xf32> to vector<1x512xf32>
    %24 = arith.subf %1, %23 : vector<1x512xf32>
    %25 = arith.truncf %24 : vector<1x512xf32> to vector<1x512xbf16>
    %26 = arith.truncf %22 : vector<32x1xf32> to vector<32x1xbf16>
    %27 = vector.broadcast %26 : vector<32x1xbf16> to vector<32x512xbf16>
    %28 = vector.broadcast %25 : vector<1x512xbf16> to vector<32x512xbf16>
    %29 = arith.mulf %27, %28 : vector<32x512xbf16>
    %c0_9 = arith.constant 0 : index
    %c0_10 = arith.constant 0 : index
    %30 = vector.load %arg8[%c0_9, %c0_10] : memref<8x512xbf16, #tpu.memory_space<vmem>>, vector<1x512xbf16>
    %c4 = arith.constant 4 : index
    %c0_11 = arith.constant 0 : index
    %31 = vector.load %arg8[%c4, %c0_11] : memref<8x512xbf16, #tpu.memory_space<vmem>>, vector<1x512xbf16>
    %32 = vector.broadcast %30 : vector<1x512xbf16> to vector<32x512xbf16>
    %33 = arith.mulf %29, %32 : vector<32x512xbf16>
    %34 = vector.broadcast %31 : vector<1x512xbf16> to vector<32x512xbf16>
    %35 = arith.addf %33, %34 : vector<32x512xbf16>
    %cst_12 = arith.constant 1.000980e-02 : bf16
    %36 = vector.broadcast %cst_12 : bf16 to vector<32x512xbf16>
    %37 = arith.mulf %36, %35 : vector<32x512xbf16>
    %38 = arith.maximumf %35, %37 : vector<32x512xbf16>
    %c0_13 = arith.constant 0 : index
    %c0_14 = arith.constant 0 : index
    %39 = vector.load %arg10[%c0_13, %c0_14] : memref<32x512xbf16, #tpu.memory_space<vmem>>, vector<32x512xbf16>
    tpu.vector_store %arg10[%c0_13, %c0_14], %38 {strides = array<i32>} : memref<32x512xbf16, #tpu.memory_space<vmem>>, vector<32x512xbf16>,
    %c0_15 = arith.constant 0 : index
    %c0_16 = arith.constant 0 : index
    %40 = vector.load %arg3[%c0_15, %c0_16] : memref<32x32xbf16, #tpu.memory_space<vmem>>, vector<32x32xbf16>
    %c0_17 = arith.constant 0 : index
    %c0_18 = arith.constant 0 : index
    %41 = vector.load %arg10[%c0_17, %c0_18] : memref<32x512xbf16, #tpu.memory_space<vmem>>, vector<32x512xbf16>
    %cst_19 = arith.constant dense<0.000000e+00> : vector<32x512xf32>
    %42 = tpu.matmul %40, %41, %cst_19 {dimension_numbers = #tpu.dot_dimension_numbers<[1], [0], [0], [1], [0, 0, 1, 1], [], []>} : vector<32x32xbf16>, vector<32x512xbf16>, vector<32x512xf32> -> vector<32x512xf32>
    %cst_20 = arith.constant dense<0.000000e+00> : vector<32xf32>
    %43 = vector.multi_reduction <add>, %42, %cst_20 [1] : vector<32x512xf32> to vector<32xf32>
    %44 = vector.shape_cast %43 : vector<32xf32> to vector<32x1xf32>
    %45 = arith.mulf %42, %42 : vector<32x512xf32>
    %cst_21 = arith.constant dense<0.000000e+00> : vector<32xf32>
    %46 = vector.multi_reduction <add>, %45, %cst_21 [1] : vector<32x512xf32> to vector<32xf32>
    %47 = vector.shape_cast %46 : vector<32xf32> to vector<32x1xf32>
    %cst_22 = arith.constant 0.001953125 : f32
    %48 = vector.broadcast %cst_22 : f32 to vector<32x1xf32>
    %49 = arith.mulf %44, %48 : vector<32x1xf32>
    %cst_23 = arith.constant 0.001953125 : f32
    %50 = vector.broadcast %cst_23 : f32 to vector<32x1xf32>
    %51 = arith.mulf %47, %50 : vector<32x1xf32>
    %52 = arith.mulf %49, %49 : vector<32x1xf32>
    %53 = arith.subf %51, %52 : vector<32x1xf32>
    %cst_24 = arith.constant 0.000000e+00 : f32
    %54 = vector.broadcast %cst_24 : f32 to vector<32x1xf32>
    %55 = arith.maximumf %53, %54 : vector<32x1xf32>
    %cst_25 = arith.constant 9.99999974E-6 : f32
    %56 = vector.broadcast %cst_25 : f32 to vector<32x1xf32>
    %57 = arith.addf %55, %56 : vector<32x1xf32>
    %58 = math.rsqrt %57 : vector<32x1xf32>
    %59 = vector.broadcast %49 : vector<32x1xf32> to vector<32x512xf32>
    %60 = arith.subf %42, %59 : vector<32x512xf32>
    %61 = vector.broadcast %58 : vector<32x1xf32> to vector<32x512xf32>
    %62 = arith.mulf %60, %61 : vector<32x512xf32>
    %63 = arith.truncf %62 : vector<32x512xf32> to vector<32x512xbf16>
    %c1 = arith.constant 1 : index
    %c0_26 = arith.constant 0 : index
    %64 = vector.load %arg8[%c1, %c0_26] : memref<8x512xbf16, #tpu.memory_space<vmem>>, vector<1x512xbf16>
    %c5 = arith.constant 5 : index
    %c0_27 = arith.constant 0 : index
    %65 = vector.load %arg8[%c5, %c0_27] : memref<8x512xbf16, #tpu.memory_space<vmem>>, vector<1x512xbf16>
    %66 = vector.broadcast %64 : vector<1x512xbf16> to vector<32x512xbf16>
    %67 = arith.mulf %63, %66 : vector<32x512xbf16>
    %68 = vector.broadcast %65 : vector<1x512xbf16> to vector<32x512xbf16>
    %69 = arith.addf %67, %68 : vector<32x512xbf16>
    %cst_28 = arith.constant 1.000980e-02 : bf16
    %70 = vector.broadcast %cst_28 : bf16 to vector<32x512xbf16>
    %71 = arith.mulf %70, %69 : vector<32x512xbf16>
    %72 = arith.maximumf %69, %71 : vector<32x512xbf16>
    %c0_29 = arith.constant 0 : index
    %c0_30 = arith.constant 0 : index
    %73 = vector.load %arg10[%c0_29, %c0_30] : memref<32x512xbf16, #tpu.memory_space<vmem>>, vector<32x512xbf16>
    tpu.vector_store %arg10[%c0_29, %c0_30], %72 {strides = array<i32>} : memref<32x512xbf16, #tpu.memory_space<vmem>>, vector<32x512xbf16>,
    %c0_31 = arith.constant 0 : index
    %c0_32 = arith.constant 0 : index
    %74 = vector.load %arg4[%c0_31, %c0_32] : memref<32x32xbf16, #tpu.memory_space<vmem>>, vector<32x32xbf16>
    %c0_33 = arith.constant 0 : index
    %c0_34 = arith.constant 0 : index
    %75 = vector.load %arg10[%c0_33, %c0_34] : memref<32x512xbf16, #tpu.memory_space<vmem>>, vector<32x512xbf16>
    %cst_35 = arith.constant dense<0.000000e+00> : vector<32x512xf32>
    %76 = tpu.matmul %74, %75, %cst_35 {dimension_numbers = #tpu.dot_dimension_numbers<[1], [0], [0], [1], [0, 0, 1, 1], [], []>} : vector<32x32xbf16>, vector<32x512xbf16>, vector<32x512xf32> -> vector<32x512xf32>
    %cst_36 = arith.constant dense<0.000000e+00> : vector<32xf32>
    %77 = vector.multi_reduction <add>, %76, %cst_36 [1] : vector<32x512xf32> to vector<32xf32>
    %78 = vector.shape_cast %77 : vector<32xf32> to vector<32x1xf32>
    %79 = arith.mulf %76, %76 : vector<32x512xf32>
    %cst_37 = arith.constant dense<0.000000e+00> : vector<32xf32>
    %80 = vector.multi_reduction <add>, %79, %cst_37 [1] : vector<32x512xf32> to vector<32xf32>
    %81 = vector.shape_cast %80 : vector<32xf32> to vector<32x1xf32>
    %cst_38 = arith.constant 0.001953125 : f32
    %82 = vector.broadcast %cst_38 : f32 to vector<32x1xf32>
    %83 = arith.mulf %78, %82 : vector<32x1xf32>
    %cst_39 = arith.constant 0.001953125 : f32
    %84 = vector.broadcast %cst_39 : f32 to vector<32x1xf32>
    %85 = arith.mulf %81, %84 : vector<32x1xf32>
    %86 = arith.mulf %83, %83 : vector<32x1xf32>
    %87 = arith.subf %85, %86 : vector<32x1xf32>
    %cst_40 = arith.constant 0.000000e+00 : f32
    %88 = vector.broadcast %cst_40 : f32 to vector<32x1xf32>
    %89 = arith.maximumf %87, %88 : vector<32x1xf32>
    %cst_41 = arith.constant 9.99999974E-6 : f32
    %90 = vector.broadcast %cst_41 : f32 to vector<32x1xf32>
    %91 = arith.addf %89, %90 : vector<32x1xf32>
    %92 = math.rsqrt %91 : vector<32x1xf32>
    %93 = vector.broadcast %83 : vector<32x1xf32> to vector<32x512xf32>
    %94 = arith.subf %76, %93 : vector<32x512xf32>
    %95 = vector.broadcast %92 : vector<32x1xf32> to vector<32x512xf32>
    %96 = arith.mulf %94, %95 : vector<32x512xf32>
    %97 = arith.truncf %96 : vector<32x512xf32> to vector<32x512xbf16>
    %c2 = arith.constant 2 : index
    %c0_42 = arith.constant 0 : index
    %98 = vector.load %arg8[%c2, %c0_42] : memref<8x512xbf16, #tpu.memory_space<vmem>>, vector<1x512xbf16>
    %c6 = arith.constant 6 : index
    %c0_43 = arith.constant 0 : index
    %99 = vector.load %arg8[%c6, %c0_43] : memref<8x512xbf16, #tpu.memory_space<vmem>>, vector<1x512xbf16>
    %100 = vector.broadcast %98 : vector<1x512xbf16> to vector<32x512xbf16>
    %101 = arith.mulf %97, %100 : vector<32x512xbf16>
    %102 = vector.broadcast %99 : vector<1x512xbf16> to vector<32x512xbf16>
    %103 = arith.addf %101, %102 : vector<32x512xbf16>
    %cst_44 = arith.constant 1.000980e-02 : bf16
    %104 = vector.broadcast %cst_44 : bf16 to vector<32x512xbf16>
    %105 = arith.mulf %104, %103 : vector<32x512xbf16>
    %106 = arith.maximumf %103, %105 : vector<32x512xbf16>
    %c0_45 = arith.constant 0 : index
    %c0_46 = arith.constant 0 : index
    %107 = vector.load %arg10[%c0_45, %c0_46] : memref<32x512xbf16, #tpu.memory_space<vmem>>, vector<32x512xbf16>
    tpu.vector_store %arg10[%c0_45, %c0_46], %106 {strides = array<i32>} : memref<32x512xbf16, #tpu.memory_space<vmem>>, vector<32x512xbf16>,
    %c0_47 = arith.constant 0 : index
    %c0_48 = arith.constant 0 : index
    %108 = vector.load %arg5[%c0_47, %c0_48] : memref<32x32xbf16, #tpu.memory_space<vmem>>, vector<32x32xbf16>
    %c0_49 = arith.constant 0 : index
    %c0_50 = arith.constant 0 : index
    %109 = vector.load %arg10[%c0_49, %c0_50] : memref<32x512xbf16, #tpu.memory_space<vmem>>, vector<32x512xbf16>
    %cst_51 = arith.constant dense<0.000000e+00> : vector<32x512xf32>
    %110 = tpu.matmul %108, %109, %cst_51 {dimension_numbers = #tpu.dot_dimension_numbers<[1], [0], [0], [1], [0, 0, 1, 1], [], []>} : vector<32x32xbf16>, vector<32x512xbf16>, vector<32x512xf32> -> vector<32x512xf32>
    %cst_52 = arith.constant dense<0.000000e+00> : vector<32xf32>
    %111 = vector.multi_reduction <add>, %110, %cst_52 [1] : vector<32x512xf32> to vector<32xf32>
    %112 = vector.shape_cast %111 : vector<32xf32> to vector<32x1xf32>
    %113 = arith.mulf %110, %110 : vector<32x512xf32>
    %cst_53 = arith.constant dense<0.000000e+00> : vector<32xf32>
    %114 = vector.multi_reduction <add>, %113, %cst_53 [1] : vector<32x512xf32> to vector<32xf32>
    %115 = vector.shape_cast %114 : vector<32xf32> to vector<32x1xf32>
    %cst_54 = arith.constant 0.001953125 : f32
    %116 = vector.broadcast %cst_54 : f32 to vector<32x1xf32>
    %117 = arith.mulf %112, %116 : vector<32x1xf32>
    %cst_55 = arith.constant 0.001953125 : f32
    %118 = vector.broadcast %cst_55 : f32 to vector<32x1xf32>
    %119 = arith.mulf %115, %118 : vector<32x1xf32>
    %120 = arith.mulf %117, %117 : vector<32x1xf32>
    %121 = arith.subf %119, %120 : vector<32x1xf32>
    %cst_56 = arith.constant 0.000000e+00 : f32
    %122 = vector.broadcast %cst_56 : f32 to vector<32x1xf32>
    %123 = arith.maximumf %121, %122 : vector<32x1xf32>
    %cst_57 = arith.constant 9.99999974E-6 : f32
    %124 = vector.broadcast %cst_57 : f32 to vector<32x1xf32>
    %125 = arith.addf %123, %124 : vector<32x1xf32>
    %126 = math.rsqrt %125 : vector<32x1xf32>
    %127 = vector.broadcast %117 : vector<32x1xf32> to vector<32x512xf32>
    %128 = arith.subf %110, %127 : vector<32x512xf32>
    %129 = vector.broadcast %126 : vector<32x1xf32> to vector<32x512xf32>
    %130 = arith.mulf %128, %129 : vector<32x512xf32>
    %131 = arith.truncf %130 : vector<32x512xf32> to vector<32x512xbf16>
    %c3 = arith.constant 3 : index
    %c0_58 = arith.constant 0 : index
    %132 = vector.load %arg8[%c3, %c0_58] : memref<8x512xbf16, #tpu.memory_space<vmem>>, vector<1x512xbf16>
    %c7 = arith.constant 7 : index
    %c0_59 = arith.constant 0 : index
    %133 = vector.load %arg8[%c7, %c0_59] : memref<8x512xbf16, #tpu.memory_space<vmem>>, vector<1x512xbf16>
    %134 = vector.broadcast %132 : vector<1x512xbf16> to vector<32x512xbf16>
    %135 = arith.mulf %131, %134 : vector<32x512xbf16>
    %136 = vector.broadcast %133 : vector<1x512xbf16> to vector<32x512xbf16>
    %137 = arith.addf %135, %136 : vector<32x512xbf16>
    %cst_60 = arith.constant 1.000980e-02 : bf16
    %138 = vector.broadcast %cst_60 : bf16 to vector<32x512xbf16>
    %139 = arith.mulf %138, %137 : vector<32x512xbf16>
    %140 = arith.maximumf %137, %139 : vector<32x512xbf16>
    %c0_61 = arith.constant 0 : index
    %c0_62 = arith.constant 0 : index
    %141 = vector.load %arg10[%c0_61, %c0_62] : memref<32x512xbf16, #tpu.memory_space<vmem>>, vector<32x512xbf16>
    tpu.vector_store %arg10[%c0_61, %c0_62], %140 {strides = array<i32>} : memref<32x512xbf16, #tpu.memory_space<vmem>>, vector<32x512xbf16>,
    %c0_63 = arith.constant 0 : index
    %c0_64 = arith.constant 0 : index
    %142 = vector.load %arg6[%c0_63, %c0_64] : memref<32x32xbf16, #tpu.memory_space<vmem>>, vector<32x32xbf16>
    %c0_65 = arith.constant 0 : index
    %c0_66 = arith.constant 0 : index
    %143 = vector.load %arg10[%c0_65, %c0_66] : memref<32x512xbf16, #tpu.memory_space<vmem>>, vector<32x512xbf16>
    %cst_67 = arith.constant dense<0.000000e+00> : vector<32x512xf32>
    %144 = tpu.matmul %142, %143, %cst_67 {dimension_numbers = #tpu.dot_dimension_numbers<[1], [0], [0], [1], [0, 0, 1, 1], [], []>} : vector<32x32xbf16>, vector<32x512xbf16>, vector<32x512xf32> -> vector<32x512xf32>
    %145 = arith.truncf %144 : vector<32x512xf32> to vector<32x512xbf16>
    %cst_68 = arith.constant 1.000980e-02 : bf16
    %146 = vector.broadcast %cst_68 : bf16 to vector<32x512xbf16>
    %147 = arith.mulf %146, %145 : vector<32x512xbf16>
    %148 = arith.maximumf %145, %147 : vector<32x512xbf16>
    %c0_69 = arith.constant 0 : index
    %c0_70 = arith.constant 0 : index
    %149 = vector.load %arg7[%c0_69, %c0_70] : memref<8x32xbf16, #tpu.memory_space<vmem>>, vector<8x32xbf16>
    %cst_71 = arith.constant dense<0.000000e+00> : vector<8x512xf32>
    %150 = tpu.matmul %149, %148, %cst_71 {dimension_numbers = #tpu.dot_dimension_numbers<[1], [0], [0], [1], [0, 0, 1, 1], [], []>} : vector<8x32xbf16>, vector<32x512xbf16>, vector<8x512xf32> -> vector<8x512xf32>
    %151 = vector.extract_strided_slice %150 {offsets = [0, 0], sizes = [1, 512], strides = [1, 1]} : vector<8x512xf32> to vector<1x512xf32>
    %cst_72 = arith.constant 0.000000e+00 : f32
    %152 = vector.broadcast %cst_72 : f32 to vector<1x512xf32>
    %153 = arith.maximumf %151, %152 : vector<1x512xf32>
    %c0_73 = arith.constant 0 : index
    %c0_74 = arith.constant 0 : index
    %c0_75 = arith.constant 0 : index
    %154 = vector.load %arg9[%c0_73, %c0_74, %c0_75] : memref<1x1x512xf32, #tpu.memory_space<vmem>>, vector<1x1x512xf32>
    %155 = vector.shape_cast %154 : vector<1x1x512xf32> to vector<1x512xf32>
    %156 = vector.shape_cast %153 : vector<1x512xf32> to vector<1x1x512xf32>
    tpu.vector_store %arg9[%c0_73, %c0_74, %c0_75], %156 {strides = array<i32>} : memref<1x1x512xf32, #tpu.memory_space<vmem>>, vector<1x1x512xf32>,
    return
  }
  func.func @transform_0(%arg0: i32) -> (i32, i32, i32) {
    %c0_i32 = arith.constant 0 : i32
    %c0_i32_0 = arith.constant 0 : i32
    %c0_i32_1 = arith.constant 0 : i32
    return %arg0, %c0_i32, %c0_i32_0 : i32, i32, i32
  }
  func.func @transform_1(%arg0: i32) -> (i32, i32) {
    %c0_i32 = arith.constant 0 : i32
    %c0_i32_0 = arith.constant 0 : i32
    %c0_i32_1 = arith.constant 0 : i32
    return %c0_i32, %c0_i32_0 : i32, i32
  }
  func.func @transform_2(%arg0: i32) -> (i32, i32) {
    %c0_i32 = arith.constant 0 : i32
    %c0_i32_0 = arith.constant 0 : i32
    %c0_i32_1 = arith.constant 0 : i32
    return %c0_i32, %c0_i32_0 : i32, i32
  }
  func.func @transform_3(%arg0: i32) -> (i32, i32) {
    %c0_i32 = arith.constant 0 : i32
    %c0_i32_0 = arith.constant 0 : i32
    %c0_i32_1 = arith.constant 0 : i32
    return %c0_i32, %c0_i32_0 : i32, i32
  }
  func.func @transform_4(%arg0: i32) -> (i32, i32) {
    %c0_i32 = arith.constant 0 : i32
    %c0_i32_0 = arith.constant 0 : i32
    %c0_i32_1 = arith.constant 0 : i32
    return %c0_i32, %c0_i32_0 : i32, i32
  }
  func.func @transform_5(%arg0: i32) -> (i32, i32) {
    %c0_i32 = arith.constant 0 : i32
    %c0_i32_0 = arith.constant 0 : i32
    %c0_i32_1 = arith.constant 0 : i32
    return %c0_i32, %c0_i32_0 : i32, i32
  }
  func.func @transform_6(%arg0: i32) -> (i32, i32) {
    %c0_i32 = arith.constant 0 : i32
    %c0_i32_0 = arith.constant 0 : i32
    %c0_i32_1 = arith.constant 0 : i32
    return %c0_i32, %c0_i32_0 : i32, i32
  }
  func.func @transform_7(%arg0: i32) -> (i32, i32) {
    %c0_i32 = arith.constant 0 : i32
    %c0_i32_0 = arith.constant 0 : i32
    %c0_i32_1 = arith.constant 0 : i32
    return %c0_i32, %c0_i32_0 : i32, i32
  }
  func.func @transform_8(%arg0: i32) -> (i32, i32, i32) {
    %c0_i32 = arith.constant 0 : i32
    %c0_i32_0 = arith.constant 0 : i32
    %c0_i32_1 = arith.constant 0 : i32
    return %arg0, %c0_i32, %c0_i32_0 : i32, i32, i32
  }
}

</mosaic_0001>

<llo_original>
// kernel: tpu_custom_call.1
$region0: #{tpu_custom_call.1}
  #allocation0 [shape = 'u32[]', space=smem, size = 0x4, offset = 0x4, fixed_abs, tag = 'smem constant byte address 0x4 - core index']
  #allocation1 [shape = 'u32[144,128]{1,0:T(1,128)}', space=vmem, size = 0x12000, scoped, tag = 'internal scratch']
  #allocation2 [shape = 'bf16[32,512]{1,0:T(16,128)(2,1)}', space=vmem, size = 0x8000, scoped, tag = 'scratch operand']
  %s0 = inlined_call_operand.hbm [shape: f32[2,1,512], index: 0, kind: input, shape index: {}]
  %s1 = inlined_call_operand.vmem [shape: f32[32,1], index: 1, kind: input, shape index: {}]
  %s2 = inlined_call_operand.vmem [shape: bf16[32,32], index: 2, kind: input, shape index: {}]
  %s3 = inlined_call_operand.vmem [shape: bf16[32,32], index: 3, kind: input, shape index: {}]
  %s4 = inlined_call_operand.vmem [shape: bf16[32,32], index: 4, kind: input, shape index: {}]
  %s5 = inlined_call_operand.hbm [shape: bf16[32,32], index: 5, kind: input, shape index: {}]
  %s6 = inlined_call_operand.vmem [shape: bf16[8,32], index: 6, kind: input, shape index: {}]
  %s7 = inlined_call_operand.hbm [shape: bf16[8,512], index: 7, kind: input, shape index: {}]
  %s8 = inlined_call_operand.hbm [shape: f32[2,1,512], index: 8, kind: output, shape index: {}]
  %s9 = sld [smem:[#allocation0]]
  $region77: #{tpu_custom_call.1} parent=0
    _
  %s11 = ssub.s32 1, %s9
  %s12 = scalar_select 0, %s11, %s9
  $region1: #{tpu_custom_call.1} parent=0
    #allocation3 [shape = 'u8[4096]{0}', space=vmem, size = 0x1000, scoped, tag = 'input window, operand 0']
    #allocation4 [shape = 's32[2]{0}', space=sflag, size = 0x8, scoped, tag = 'scoped memory for tpu_custom_call.1']
    #allocation5 [shape = 's32[2]{0}', space=sflag, size = 0x8, scoped, tag = 'scoped memory for tpu_custom_call.1']
    #allocation6 [shape = 'u8[8192]{0}', space=vmem, size = 0x2000, scoped, tag = 'input window, operand 5, single buffered']
    #allocation7 [shape = 's32[1]{0}', space=sflag, size = 0x4, scoped, tag = 'scoped memory for tpu_custom_call.1']
    #allocation8 [shape = 'u8[8192]{0}', space=vmem, size = 0x2000, scoped, tag = 'input window, operand 7, single buffered']
    #allocation9 [shape = 'u8[4096]{0}', space=vmem, size = 0x1000, scoped, tag = 'output window, operand 0']
    %13 = vsyncpa [#allocation4], 0
    %s14 = scalar_lea.sflag [#allocation4], 1
    %15 = vsyncpa %s14, 0
    %16 = vsyncpa [#allocation7], 0
    %17 = vsyncpa [#allocation5], 0
    %s18 = scalar_lea.sflag [#allocation5], 1
    %19 = vsyncpa %s18, 0
    loop: start=0, step=1, limit=4
    $region2: #{tpu_custom_call.1} parent=1 // loop_pre_header
      _
    $region3: #{tpu_custom_call.1} parent=1 // loop_header
      %s21 = sphi 0, %s25
      %p22 = scmp.ge.s32.totalorder %s21, 4
      %s31 = sphi 0, %s33
      %s34 = sphi 0, %s31
      %s35 = sphi 0, %s34
      %s51 = sphi 0, %s35
      %s55 = sphi 0, %s55
      %s57 = sphi 0, %s55
      %s58 = sphi 0, %s57
      %s72 = sphi 0, %s58
      %s76 = sphi 0, %s76
      %s78 = sphi 0, %s76
      %s79 = sphi 0, %s78
      %s93 = sphi 0, %s79
      %s97 = sphi 0, %s97
      %s99 = sphi 0, %s97
      %s100 = sphi 0, %s99
      %s114 = sphi 0, %s100
      %s118 = sphi 0, %s118
      %s120 = sphi 0, %s118
      %s121 = sphi 0, %s120
      %s135 = sphi 0, %s121
      %s139 = sphi 0, %s139
      %s141 = sphi 0, %s139
      %s142 = sphi 0, %s141
      %s156 = sphi 0, %s142
      %s160 = sphi 0, %s160
      %s162 = sphi 0, %s160
      %s163 = sphi 0, %s162
      %s177 = sphi 0, %s163
      %s181 = sphi 0, %s181
      %s183 = sphi 0, %s181
      %s184 = sphi 0, %s183
      %s198 = sphi 0, %s184
      %s204 = sphi 0, %s206
      %s207 = sphi 0, %s204
      %s208 = sphi 0, %s207
      %s224 = sphi 0, %s208
    $region4: #{tpu_custom_call.1} parent=1 // loop_header_branch
      %24 = sbr.rel (%p22) target = $region8
    $region5: #{tpu_custom_call.1} parent=1 // loop_body
      %s26 = ssub.s32 %s21, 1
      %s27 = ssub.s32 %s21, 2
      %s28 = sadd.s32 %s21, 1
      %s29 = ssub.s32 %s21, %s28
      %p30 = scmp.eq.s32.totalorder %s29, 0
      %s32 = sadd.s32 %s31, 1
      %s33 = scalar_select %p30, %s31, %s32
      %p36 = pneg %p30
      %p37 = scmp.eq.s32.totalorder %s21, 1
      %p38 = por %p36, %p37
      %p39 = scmp.ne.s32.totalorder %s31, %s34
      %p40 = scmp.eq.s32.totalorder %s21, 0
      %p41 = por %p39, %p40
      %p42 = scmp.ne.s32.totalorder %s31, %s34
      %p43 = scmp.eq.s32.totalorder %s26, 1
      %p44 = por %p42, %p43
      %p45 = scmp.ne.s32.totalorder %s34, %s35
      %p46 = scmp.eq.s32.totalorder %s26, 0
      %p47 = por %p45, %p46
      %p48 = scmp.ne.s32.totalorder %s34, %s35
      %p49 = scmp.eq.s32.totalorder %s27, 1
      %p50 = por %p48, %p49
      %p52 = scmp.ne.s32.totalorder %s35, %s51
      %p53 = scmp.eq.s32.totalorder %s27, 0
      %p54 = por %p52, %p53
      %s56 = sadd.s32 %s55, 1
      %p59 = scmp.eq.s32.totalorder %s21, 1
      %p60 = scmp.ne.s32.totalorder %s55, %s57
      %p61 = scmp.eq.s32.totalorder %s21, 0
      %p62 = por %p60, %p61
      %p63 = scmp.ne.s32.totalorder %s55, %s57
      %p64 = scmp.eq.s32.totalorder %s26, 1
      %p65 = por %p63, %p64
      %p66 = scmp.ne.s32.totalorder %s57, %s58
      %p67 = scmp.eq.s32.totalorder %s26, 0
      %p68 = por %p66, %p67
      %p69 = scmp.ne.s32.totalorder %s57, %s58
      %p70 = scmp.eq.s32.totalorder %s27, 1
      %p71 = por %p69, %p70
      %p73 = scmp.ne.s32.totalorder %s58, %s72
      %p74 = scmp.eq.s32.totalorder %s27, 0
      %p75 = por %p73, %p74
      %s77 = sadd.s32 %s76, 1
      %p80 = scmp.eq.s32.totalorder %s21, 1
      %p81 = scmp.ne.s32.totalorder %s76, %s78
      %p82 = scmp.eq.s32.totalorder %s21, 0
      %p83 = por %p81, %p82
      %p84 = scmp.ne.s32.totalorder %s76, %s78
      %p85 = scmp.eq.s32.totalorder %s26, 1
      %p86 = por %p84, %p85
      %p87 = scmp.ne.s32.totalorder %s78, %s79
      %p88 = scmp.eq.s32.totalorder %s26, 0
      %p89 = por %p87, %p88
      %p90 = scmp.ne.s32.totalorder %s78, %s79
      %p91 = scmp.eq.s32.totalorder %s27, 1
      %p92 = por %p90, %p91
      %p94 = scmp.ne.s32.totalorder %s79, %s93
      %p95 = scmp.eq.s32.totalorder %s27, 0
      %p96 = por %p94, %p95
      %s98 = sadd.s32 %s97, 1
      %p101 = scmp.eq.s32.totalorder %s21, 1
      %p102 = scmp.ne.s32.totalorder %s97, %s99
      %p103 = scmp.eq.s32.totalorder %s21, 0
      %p104 = por %p102, %p103
      %p105 = scmp.ne.s32.totalorder %s97, %s99
      %p106 = scmp.eq.s32.totalorder %s26, 1
      %p107 = por %p105, %p106
      %p108 = scmp.ne.s32.totalorder %s99, %s100
      %p109 = scmp.eq.s32.totalorder %s26, 0
      %p110 = por %p108, %p109
      %p111 = scmp.ne.s32.totalorder %s99, %s100
      %p112 = scmp.eq.s32.totalorder %s27, 1
      %p113 = por %p111, %p112
      %p115 = scmp.ne.s32.totalorder %s100, %s114
      %p116 = scmp.eq.s32.totalorder %s27, 0
      %p117 = por %p115, %p116
      %s119 = sadd.s32 %s118, 1
      %p122 = scmp.eq.s32.totalorder %s21, 1
      %p123 = scmp.ne.s32.totalorder %s118, %s120
      %p124 = scmp.eq.s32.totalorder %s21, 0
      %p125 = por %p123, %p124
      %p126 = scmp.ne.s32.totalorder %s118, %s120
      %p127 = scmp.eq.s32.totalorder %s26, 1
      %p128 = por %p126, %p127
      %p129 = scmp.ne.s32.totalorder %s120, %s121
      %p130 = scmp.eq.s32.totalorder %s26, 0
      %p131 = por %p129, %p130
      %p132 = scmp.ne.s32.totalorder %s120, %s121
      %p133 = scmp.eq.s32.totalorder %s27, 1
      %p134 = por %p132, %p133
      %p136 = scmp.ne.s32.totalorder %s121, %s135
      %p137 = scmp.eq.s32.totalorder %s27, 0
      %p138 = por %p136, %p137
      %s140 = sadd.s32 %s139, 1
      %p143 = scmp.eq.s32.totalorder %s21, 1
      %p144 = scmp.ne.s32.totalorder %s139, %s141
      %p145 = scmp.eq.s32.totalorder %s21, 0
      %p146 = por %p144, %p145
      %p147 = scmp.ne.s32.totalorder %s139, %s141
      %p148 = scmp.eq.s32.totalorder %s26, 1
      %p149 = por %p147, %p148
      %p150 = scmp.ne.s32.totalorder %s141, %s142
      %p151 = scmp.eq.s32.totalorder %s26, 0
      %p152 = por %p150, %p151
      %p153 = scmp.ne.s32.totalorder %s141, %s142
      %p154 = scmp.eq.s32.totalorder %s27, 1
      %p155 = por %p153, %p154
      %p157 = scmp.ne.s32.totalorder %s142, %s156
      %p158 = scmp.eq.s32.totalorder %s27, 0
      %p159 = por %p157, %p158
      %s161 = sadd.s32 %s160, 1
      %p164 = scmp.eq.s32.totalorder %s21, 1
      %p165 = scmp.ne.s32.totalorder %s160, %s162
      %p166 = scmp.eq.s32.totalorder %s21, 0
      %p167 = por %p165, %p166
      %p168 = scmp.ne.s32.totalorder %s160, %s162
      %p169 = scmp.eq.s32.totalorder %s26, 1
      %p170 = por %p168, %p169
      %p171 = scmp.ne.s32.totalorder %s162, %s163
      %p172 = scmp.eq.s32.totalorder %s26, 0
      %p173 = por %p171, %p172
      %p174 = scmp.ne.s32.totalorder %s162, %s163
      %p175 = scmp.eq.s32.totalorder %s27, 1
      %p176 = por %p174, %p175
      %p178 = scmp.ne.s32.totalorder %s163, %s177
      %p179 = scmp.eq.s32.totalorder %s27, 0
      %p180 = por %p178, %p179
      %s182 = sadd.s32 %s181, 1
      %p185 = scmp.eq.s32.totalorder %s21, 1
      %p186 = scmp.ne.s32.totalorder %s181, %s183
      %p187 = scmp.eq.s32.totalorder %s21, 0
      %p188 = por %p186, %p187
      %p189 = scmp.ne.s32.totalorder %s181, %s183
      %p190 = scmp.eq.s32.totalorder %s26, 1
      %p191 = por %p189, %p190
      %p192 = scmp.ne.s32.totalorder %s183, %s184
      %p193 = scmp.eq.s32.totalorder %s26, 0
      %p194 = por %p192, %p193
      %p195 = scmp.ne.s32.totalorder %s183, %s184
      %p196 = scmp.eq.s32.totalorder %s27, 1
      %p197 = por %p195, %p196
      %p199 = scmp.ne.s32.totalorder %s184, %s198
      %p200 = scmp.eq.s32.totalorder %s27, 0
      %p201 = por %p199, %p200
      %s202 = ssub.s32 %s21, %s28
      %p203 = scmp.eq.s32.totalorder %s202, 0
      %s205 = sadd.s32 %s204, 1
      %s206 = scalar_select %p203, %s204, %s205
      %p209 = pneg %p203
      %p210 = scmp.eq.s32.totalorder %s21, 1
      %p211 = por %p209, %p210
      %p212 = scmp.ne.s32.totalorder %s204, %s207
      %p213 = scmp.eq.s32.totalorder %s21, 0
      %p214 = por %p212, %p213
      %p215 = scmp.ne.s32.totalorder %s204, %s207
      %p216 = scmp.eq.s32.totalorder %s26, 1
      %p217 = por %p215, %p216
      %p218 = scmp.ne.s32.totalorder %s207, %s208
      %p219 = scmp.eq.s32.totalorder %s26, 0
      %p220 = por %p218, %p219
      %p221 = scmp.ne.s32.totalorder %s207, %s208
      %p222 = scmp.eq.s32.totalorder %s27, 1
      %p223 = por %p221, %p222
      %p225 = scmp.ne.s32.totalorder %s208, %s224
      %p226 = scmp.eq.s32.totalorder %s27, 0
      %p227 = por %p225, %p226
      %p228 = scmp.le.s32.totalorder 1, %s21
      %p229 = scmp.lt.s32.totalorder %s21, 3
      %p230 = pnand %p228, %p229
      %p231 = pneg %p230
      // Predicated region
      $region9: #{tpu_custom_call.1} parent=5 // pred_check
        _
      $region10: #{tpu_custom_call.1} parent=5 // pred_check_branch
        %233 = sbr.rel (%p230) target = $region12
      $region11: #{tpu_custom_call.1} parent=5 // pred_region
        %s234 = ssub.s32 %s21, 1
        // Predicated region
        $region13: #{tpu_custom_call.1} parent=11 // pred_check
          %p235 = pneg %p68
        $region14: #{tpu_custom_call.1} parent=11 // pred_check_branch
          %237 = sbr.rel (%p235) target = $region16
        $region15: #{tpu_custom_call.1} parent=11 // pred_region
          _
        $region16: #{tpu_custom_call.1} parent=11 // pred_fallthru
          _
        // Predicated region
        $region17: #{tpu_custom_call.1} parent=11 // pred_check
          %p238 = pneg %p89
        $region18: #{tpu_custom_call.1} parent=11 // pred_check_branch
          %240 = sbr.rel (%p238) target = $region20
        $region19: #{tpu_custom_call.1} parent=11 // pred_region
          _
        $region20: #{tpu_custom_call.1} parent=11 // pred_fallthru
          _
        // Predicated region
        $region21: #{tpu_custom_call.1} parent=11 // pred_check
          %p241 = pneg %p110
        $region22: #{tpu_custom_call.1} parent=11 // pred_check_branch
          %243 = sbr.rel (%p241) target = $region24
        $region23: #{tpu_custom_call.1} parent=11 // pred_region
          _
        $region24: #{tpu_custom_call.1} parent=11 // pred_fallthru
          _
        // Predicated region
        $region25: #{tpu_custom_call.1} parent=11 // pred_check
          %p244 = pneg %p131
        $region26: #{tpu_custom_call.1} parent=11 // pred_check_branch
          %246 = sbr.rel (%p244) target = $region28
        $region27: #{tpu_custom_call.1} parent=11 // pred_region
          _
        $region28: #{tpu_custom_call.1} parent=11 // pred_fallthru
          _
        // Predicated region
        $region29: #{tpu_custom_call.1} parent=11 // pred_check
          %p247 = pneg %p152
        $region30: #{tpu_custom_call.1} parent=11 // pred_check_branch
          %249 = sbr.rel (%p247) target = $region32
        $region31: #{tpu_custom_call.1} parent=11 // pred_region
          %s251 = ssub.s32 256, 256
          %252 = vsyncadd [#allocation7], %s251
          %s253 = sshll.u32 [#allocation6], 4
          %s254 = int_to_ptr.vmem [resolvable:$true] %s253
          %259 = dma.hbm_to_vmem [thread:$0]  %s5, 256, %s254, [#allocation7], 64, 64, 4
        $region32: #{tpu_custom_call.1} parent=11 // pred_fallthru
          _
        // Predicated region
        $region33: #{tpu_custom_call.1} parent=11 // pred_check
          %p260 = pneg %p173
        $region34: #{tpu_custom_call.1} parent=11 // pred_check_branch
          %262 = sbr.rel (%p260) target = $region36
        $region35: #{tpu_custom_call.1} parent=11 // pred_region
          _
        $region36: #{tpu_custom_call.1} parent=11 // pred_fallthru
          _
        // Predicated region
        $region37: #{tpu_custom_call.1} parent=11 // pred_check
          %p263 = pneg %p194
        $region38: #{tpu_custom_call.1} parent=11 // pred_check_branch
          %265 = sbr.rel (%p263) target = $region40
        $region39: #{tpu_custom_call.1} parent=11 // pred_region
          %s267 = ssub.s32 256, 256
          %268 = vsyncadd [#allocation7], %s267
          %s270 = sshll.u32 [#allocation8], 4
          %s271 = int_to_ptr.vmem [resolvable:$true] %s270
          %273 = dma.hbm_to_vmem [thread:$0]  %s7, 256, %s271, [#allocation7]
        $region40: #{tpu_custom_call.1} parent=11 // pred_fallthru
          _
      $region12: #{tpu_custom_call.1} parent=5 // pred_fallthru
        _
      %p274 = scmp.lt.s32.totalorder %s21, 2
      // Predicated region
      $region41: #{tpu_custom_call.1} parent=5 // pred_check
        %p275 = pneg %p274
      $region42: #{tpu_custom_call.1} parent=5 // pred_check_branch
        %277 = sbr.rel (%p275) target = $region44
      $region43: #{tpu_custom_call.1} parent=5 // pred_region
        // Predicated region
        $region45: #{tpu_custom_call.1} parent=43 // pred_check
          %p278 = pneg %p41
        $region46: #{tpu_custom_call.1} parent=43 // pred_check_branch
          %280 = sbr.rel (%p278) target = $region48
        $region47: #{tpu_custom_call.1} parent=43 // pred_region
          %s281 = sand.u32 %s31, 1
          %s282 = scalar_lea.sflag [#allocation4], %s281
          %s283 = sand.u32 %s31, 1
          %s284 = smul.addr %s283, 4
          %s285 = scalar_lea.vmem [#allocation3], %s284
          %s287 = ssub.s32 64, 64
          %288 = vsyncadd %s282, %s287
          %s289 = smul.addr %s21, 4
          %s290 = smul.addr %s289, 16
          %s291 = scalar_lea.hbm %s0, %s290
          %s293 = sshll.u32 %s285, 4
          %s294 = int_to_ptr.vmem [resolvable:$true] %s293
          %296 = dma.hbm_to_vmem [thread:$0]  %s291, 64, %s294, %s282
        $region48: #{tpu_custom_call.1} parent=43 // pred_fallthru
          _
      $region44: #{tpu_custom_call.1} parent=5 // pred_fallthru
        _
      %p297 = scmp.le.s32.totalorder 1, %s21
      %p298 = scmp.lt.s32.totalorder %s21, 3
      %p299 = pnand %p297, %p298
      %p300 = pneg %p299
      // Predicated region
      $region49: #{tpu_custom_call.1} parent=5 // pred_check
        _
      $region50: #{tpu_custom_call.1} parent=5 // pred_check_branch
        %302 = sbr.rel (%p299) target = $region52
      $region51: #{tpu_custom_call.1} parent=5 // pred_region
        %s303 = ssub.s32 %s21, 1
        %s304 = sand.u32 %s34, 1
        %s305 = scalar_lea.sflag [#allocation4], %s304
        %s306 = sand.u32 %s34, 1
        %s307 = smul.addr %s306, 4
        %s308 = scalar_lea.vmem [#allocation3], %s307
        // Predicated region
        $region53: #{tpu_custom_call.1} parent=51 // pred_check
          %p309 = pneg %p47
        $region54: #{tpu_custom_call.1} parent=51 // pred_check_branch
          %311 = sbr.rel (%p309) target = $region56
        $region55: #{tpu_custom_call.1} parent=51 // pred_region
          %312 = dma.done %s305, 64
        $region56: #{tpu_custom_call.1} parent=51 // pred_fallthru
          _
        // Predicated region
        $region57: #{tpu_custom_call.1} parent=51 // pred_check
          %p313 = pneg %p152
        $region58: #{tpu_custom_call.1} parent=51 // pred_check_branch
          %315 = sbr.rel (%p313) target = $region60
        $region59: #{tpu_custom_call.1} parent=51 // pred_region
          %316 = dma.done [#allocation7], 256
        $region60: #{tpu_custom_call.1} parent=51 // pred_fallthru
          _
        // Predicated region
        $region61: #{tpu_custom_call.1} parent=51 // pred_check
          %p317 = pneg %p194
        $region62: #{tpu_custom_call.1} parent=51 // pred_check_branch
          %319 = sbr.rel (%p317) target = $region64
        $region63: #{tpu_custom_call.1} parent=51 // pred_region
          %320 = dma.done [#allocation7], 256
        $region64: #{tpu_custom_call.1} parent=51 // pred_fallthru
          _
        %s321 = sand.u32 %s34, 1
        %s322 = scalar_lea.sflag [#allocation4], %s321
        %s323 = sand.u32 %s34, 1
        %s324 = smul.addr %s323, 4
        %s325 = scalar_lea.vmem [#allocation3], %s324
        %p326 = pneg %p47
        %p327 = pneg %p44
        %p328 = pneg %p68
        %p329 = pneg %p65
        %p330 = pneg %p89
        %p331 = pneg %p86
        %p332 = pneg %p110
        %p333 = pneg %p107
        %p334 = pneg %p131
        %p335 = pneg %p128
        %p336 = pneg %p152
        %p337 = pneg %p149
        %p338 = pneg %p173
        %p339 = pneg %p170
        %p340 = pneg %p194
        %p341 = pneg %p191
        %p342 = pneg %p220
        %p343 = pneg %p217
        %s344 = sand.u32 %s207, 1
        %s345 = scalar_lea.sflag [#allocation5], %s344
        %s346 = sand.u32 %s207, 1
        %s347 = smul.addr %s346, 4
        %s348 = scalar_lea.vmem [#allocation9], %s347
        %v351 = vld [vmem:[%s308] sm:$0xf]
        %v353 = vlaneseq
        %v354 = vshrl.u32 %v353, 7
        %v355 = vsub.s32 0, %v354
        %v356 = vrot.slane %v351, %v355
        %v357 = vlaneseq
        %v358 = vshrl.u32 %v357, 7
        %v359 = vsub.s32 1, %v358
        %v360 = vrot.slane %v351, %v359
        %v361 = vlaneseq
        %v362 = vshrl.u32 %v361, 7
        %v363 = vsub.s32 2, %v362
        %v364 = vrot.slane %v351, %v363
        %v365 = vlaneseq
        %v366 = vshrl.u32 %v365, 7
        %v367 = vsub.s32 3, %v366
        %v368 = vrot.slane %v351, %v367
        %vm373 = vcmask 1040384
        %v374 = vsel %vm373, %v356, 0.0
        %v375 = vsel %vm373, %v360, 0.0
        %v376 = vadd.f32 %v374, %v375
        %v377 = vsel %vm373, %v364, 0.0
        %v378 = vadd.f32 %v376, %v377
        %v379 = vsel %vm373, %v368, 0.0
        %v380 = vadd.f32 %v378, %v379
        %381 = vadd.xlane.f32.xlu0 %v380
        %v382 = vpop.xlane.xlu0 %381
        %v383 = vmul.f32 %v351, %v351
        %v385 = vlaneseq
        %v386 = vshrl.u32 %v385, 7
        %v387 = vsub.s32 0, %v386
        %v388 = vrot.slane %v383, %v387
        %v389 = vlaneseq
        %v390 = vshrl.u32 %v389, 7
        %v391 = vsub.s32 1, %v390
        %v392 = vrot.slane %v383, %v391
        %v393 = vlaneseq
        %v394 = vshrl.u32 %v393, 7
        %v395 = vsub.s32 2, %v394
        %v396 = vrot.slane %v383, %v395
        %v397 = vlaneseq
        %v398 = vshrl.u32 %v397, 7
        %v399 = vsub.s32 3, %v398
        %v400 = vrot.slane %v383, %v399
        %v405 = vsel %vm373, %v388, 0.0
        %v406 = vsel %vm373, %v392, 0.0
        %v407 = vadd.f32 %v405, %v406
        %v408 = vsel %vm373, %v396, 0.0
        %v409 = vadd.f32 %v407, %v408
        %v410 = vsel %vm373, %v400, 0.0
        %v411 = vadd.f32 %v409, %v410
        %412 = vadd.xlane.f32.xlu0 %v411
        %v413 = vpop.xlane.xlu0 %412
        %v414 = vmul.f32 %v382, 0.001953125
        %v415 = vmul.f32 %v413, 0.001953125
        %v416 = vmul.f32 %v414, %v414
        %v417 = vsub.f32 %v415, %v416
        %v418 = vmax.f32 %v417, 0.0
        %v419 = vld [vmem:[%s1] sm:$0xff]
        %v420 = vld [vmem:[%s1 + $0x8] sm:$0xff]
        %v421 = vld [vmem:[%s1 + $0x10] sm:$0xff]
        %v422 = vld [vmem:[%s1 + $0x18] sm:$0xff]
        %v423 = vmul.f32 %v419, %v419
        %v424 = vmul.f32 %v420, %v420
        %v425 = vmul.f32 %v421, %v421
        %v426 = vmul.f32 %v422, %v422
        %v427 = vlaneseq
        %v428 = vshrl.u32 %v427, 7
        %v429 = vsub.s32 0, %v428
        %v430 = vrot.slane %v418, %v429
        %v431 = vmul.f32 %v423, %v430
        %v432 = vmul.f32 %v424, %v430
        %v433 = vmul.f32 %v425, %v430
        %v434 = vmul.f32 %v426, %v430
        %v435 = vadd.f32 %v431, 1e-05
        %v436 = vadd.f32 %v432, 1e-05
        %v437 = vadd.f32 %v433, 1e-05
        %v438 = vadd.f32 %v434, 1e-05
        %v439 = vrsqrt.pop %v435
        %v440 = vrsqrt.pop %v436
        %v441 = vrsqrt.pop %v437
        %v442 = vrsqrt.pop %v438
        %v443 = vmul.f32 %v419, %v439
        %v444 = vmul.f32 %v420, %v440
        %v445 = vmul.f32 %v421, %v441
        %v446 = vmul.f32 %v422, %v442
        %v448 = vlaneseq
        %v449 = vshrl.u32 %v448, 7
        %v450 = vsub.s32 0, %v449
        %v451 = vrot.slane %v414, %v450
        %v453 = vsub.f32 %v351, %v451
        %v455 = vlaneseq
        %v456 = vshrl.u32 %v455, 7
        %v457 = vsub.s32 0, %v456
        %v458 = vrot.slane %v453, %v457
        %v459 = vlaneseq
        %v460 = vshrl.u32 %v459, 7
        %v461 = vsub.s32 1, %v460
        %v462 = vrot.slane %v453, %v461
        %v463 = vlaneseq
        %v464 = vshrl.u32 %v463, 7
        %v465 = vsub.s32 2, %v464
        %v466 = vrot.slane %v453, %v465
        %v467 = vlaneseq
        %v468 = vshrl.u32 %v467, 7
        %v469 = vsub.s32 3, %v468
        %v470 = vrot.slane %v453, %v469
        %v475 = vpack.c.bf16 %v458, %v458
        %v476 = vpack.c.bf16 %v462, %v462
        %v477 = vpack.c.bf16 %v466, %v466
        %v478 = vpack.c.bf16 %v470, %v470
        %v479 = vpack.c.bf16 %v444, %v443
        %v480 = vpack.c.bf16 %v446, %v445
        %482 = vset.pattern.permute.xlu0 0
        %483 = vperm.xlu0 %482, %v479
        %v484 = vpop.permute.xlu0 %483
        %487 = vset.pattern.permute.xlu0 0
        %488 = vperm.xlu0 %487, %v480
        %v489 = vpop.permute.xlu0 %488
        %v492 = vpack.i.b16 %v475, %v475
        %v494 = vlaneseq
        %v495 = vshrl.u32 %v494, 7
        %v496 = vsub.s32 0, %v495
        %v497 = vrot.slane %v492, %v496
        %v499 = vpack.i.b16 %v476, %v476
        %v501 = vlaneseq
        %v502 = vshrl.u32 %v501, 7
        %v503 = vsub.s32 0, %v502
        %v504 = vrot.slane %v499, %v503
        %v506 = vpack.i.b16 %v477, %v477
        %v508 = vlaneseq
        %v509 = vshrl.u32 %v508, 7
        %v510 = vsub.s32 0, %v509
        %v511 = vrot.slane %v506, %v510
        %v513 = vpack.i.b16 %v478, %v478
        %v515 = vlaneseq
        %v516 = vshrl.u32 %v515, 7
        %v517 = vsub.s32 0, %v516
        %v518 = vrot.slane %v513, %v517
        %v519 = vmul.bf16 %v484, %v497
        %v520 = vmul.bf16 %v484, %v504
        %v521 = vmul.bf16 %v484, %v511
        %v522 = vmul.bf16 %v484, %v518
        %v523 = vmul.bf16 %v489, %v497
        %v524 = vmul.bf16 %v489, %v504
        %v525 = vmul.bf16 %v489, %v511
        %v526 = vmul.bf16 %v489, %v518
        %v527 = vld [vmem:[#allocation8] sm:$0x11]
        %v528 = vld [vmem:[#allocation8 + $0x8] sm:$0x11]
        %v529 = vld [vmem:[#allocation8] sm:$0x44]
        %v530 = vld [vmem:[#allocation8 + $0x8] sm:$0x44]
        %v533 = vunpack.c.l.b16 %v527
        %v534 = vunpack.c.h.b16 %v527
        %v535 = vunpack.c.l.b16 %v528
        %v536 = vunpack.c.h.b16 %v528
        %v537 = vpack.c.b16 %v533, %v533
        %v538 = vpack.c.b16 %v534, %v534
        %v539 = vpack.c.b16 %v535, %v535
        %v540 = vpack.c.b16 %v536, %v536
        %v542 = vpack.i.b16 %v537, %v537
        %v544 = vlaneseq
        %v545 = vshrl.u32 %v544, 7
        %v546 = vsub.s32 0, %v545
        %v547 = vrot.slane %v542, %v546
        %v549 = vpack.i.b16 %v538, %v538
        %v551 = vlaneseq
        %v552 = vshrl.u32 %v551, 7
        %v553 = vsub.s32 0, %v552
        %v554 = vrot.slane %v549, %v553
        %v556 = vpack.i.b16 %v539, %v539
        %v558 = vlaneseq
        %v559 = vshrl.u32 %v558, 7
        %v560 = vsub.s32 0, %v559
        %v561 = vrot.slane %v556, %v560
        %v563 = vpack.i.b16 %v540, %v540
        %v565 = vlaneseq
        %v566 = vshrl.u32 %v565, 7
        %v567 = vsub.s32 0, %v566
        %v568 = vrot.slane %v563, %v567
        %v569 = vmul.bf16 %v519, %v547
        %v570 = vmul.bf16 %v520, %v554
        %v571 = vmul.bf16 %v521, %v561
        %v572 = vmul.bf16 %v522, %v568
        %v573 = vmul.bf16 %v523, %v547
        %v574 = vmul.bf16 %v524, %v554
        %v575 = vmul.bf16 %v525, %v561
        %v576 = vmul.bf16 %v526, %v568
        %v579 = vunpack.c.l.b16 %v529
        %v580 = vunpack.c.h.b16 %v529
        %v581 = vunpack.c.l.b16 %v530
        %v582 = vunpack.c.h.b16 %v530
        %v583 = vpack.c.b16 %v579, %v579
        %v584 = vpack.c.b16 %v580, %v580
        %v585 = vpack.c.b16 %v581, %v581
        %v586 = vpack.c.b16 %v582, %v582
        %v588 = vpack.i.b16 %v583, %v583
        %v590 = vlaneseq
        %v591 = vshrl.u32 %v590, 7
        %v592 = vsub.s32 2, %v591
        %v593 = vrot.slane %v588, %v592
        %v595 = vpack.i.b16 %v584, %v584
        %v597 = vlaneseq
        %v598 = vshrl.u32 %v597, 7
        %v599 = vsub.s32 2, %v598
        %v600 = vrot.slane %v595, %v599
        %v602 = vpack.i.b16 %v585, %v585
        %v604 = vlaneseq
        %v605 = vshrl.u32 %v604, 7
        %v606 = vsub.s32 2, %v605
        %v607 = vrot.slane %v602, %v606
        %v609 = vpack.i.b16 %v586, %v586
        %v611 = vlaneseq
        %v612 = vshrl.u32 %v611, 7
        %v613 = vsub.s32 2, %v612
        %v614 = vrot.slane %v609, %v613
        %v615 = vadd.bf16 %v569, %v593
        %v616 = vadd.bf16 %v570, %v600
        %v617 = vadd.bf16 %v571, %v607
        %v618 = vadd.bf16 %v572, %v614
        %v619 = vadd.bf16 %v573, %v593
        %v620 = vadd.bf16 %v574, %v600
        %v621 = vadd.bf16 %v575, %v607
        %v622 = vadd.bf16 %v576, %v614
        %v623 = vmul.bf16 %v615, 1009007652
        %v624 = vmul.bf16 %v616, 1009007652
        %v625 = vmul.bf16 %v617, 1009007652
        %v626 = vmul.bf16 %v618, 1009007652
        %v627 = vmul.bf16 %v619, 1009007652
        %v628 = vmul.bf16 %v620, 1009007652
        %v629 = vmul.bf16 %v621, 1009007652
        %v630 = vmul.bf16 %v622, 1009007652
        %v631 = vmax.bf16 %v615, %v623
        %v632 = vmax.bf16 %v616, %v624
        %v633 = vmax.bf16 %v617, %v625
        %v634 = vmax.bf16 %v618, %v626
        %v635 = vmax.bf16 %v619, %v627
        %v636 = vmax.bf16 %v620, %v628
        %v637 = vmax.bf16 %v621, %v629
        %v638 = vmax.bf16 %v622, %v630
        %639 = vst [vmem:[#allocation2] sm:$0xff] %v631
        %640 = vst [vmem:[#allocation2 + $0x8] sm:$0xff] %v632
        %641 = vst [vmem:[#allocation2 + $0x10] sm:$0xff] %v633
        %642 = vst [vmem:[#allocation2 + $0x18] sm:$0xff] %v634
        %643 = vst [vmem:[#allocation2 + $0x20] sm:$0xff] %v635
        %644 = vst [vmem:[#allocation2 + $0x28] sm:$0xff] %v636
        %645 = vst [vmem:[#allocation2 + $0x30] sm:$0xff] %v637
        %646 = vst [vmem:[#allocation2 + $0x38] sm:$0xff] %v638
        %v647 = vld [vmem:[%s2] sm:$0xf]
        %v648 = vld [vmem:[%s2 + $0x4] sm:$0xf]
        %v649 = vld [vmem:[%s2 + $0x8] sm:$0xf]
        %v650 = vld [vmem:[%s2 + $0xc] sm:$0xf]
        %v651 = vld [vmem:[#allocation2] sm:$0xff]
        %v652 = vld [vmem:[#allocation2 + $0x8] sm:$0xff]
        %v653 = vld [vmem:[#allocation2 + $0x10] sm:$0xff]
        %v654 = vld [vmem:[#allocation2 + $0x18] sm:$0xff]
        %v655 = vld [vmem:[#allocation2 + $0x20] sm:$0xff]
        %v656 = vld [vmem:[#allocation2 + $0x28] sm:$0xff]
        %v657 = vld [vmem:[#allocation2 + $0x30] sm:$0xff]
        %v658 = vld [vmem:[#allocation2 + $0x38] sm:$0xff]
        %v663 = vunpack.c.l.b16 %v647
        %v664 = vunpack.c.l.b16 %v648
        %v665 = vunpack.c.l.b16 %v649
        %v666 = vunpack.c.l.b16 %v650
        %v667 = vpack.c.b16 %v664, %v663
        %v668 = vpack.c.b16 %v666, %v665
        %vm669 = vcmask 261120
        %v671 = vsel %vm669, %v667, 0
        %v674 = vsel %vm669, %v668, 0
        %676 = vmatprep.subr.bf16.mxu0 %v652
        %677 = vmatpush1.bf16.msra.mxu0 %v651
        %678 = vmatprep.subr.bf16.mxu0 %v656
        %679 = vmatpush1.bf16.msra.mxu0 %v655
        %680 = vmatprep.subr.bf16.mxu0 0
        %681 = vmatpush1.bf16.msra.mxu0 0
        %682 = vmatprep.subr.bf16.mxu0 0
        %683 = vmatpush1.bf16.msra.mxu0 0
        %684 = vmatprep.subr.bf16.mxu0 0
        %685 = vmatpush1.bf16.msra.mxu0 0
        %686 = vmatprep.subr.bf16.mxu0 0
        %687 = vmatpush1.bf16.msra.mxu0 0
        %688 = vmatprep.subr.bf16.mxu0 0
        %689 = vmatpush1.bf16.msra.mxu0 0
        %690 = vmatprep.subr.bf16.mxu0 0
        %691 = vmatpush1.bf16.msra.mxu0 0
        %692 = vmatprep.subr.bf16.mxu0 0
        %693 = vmatpush1.bf16.msra.mxu0 0
        %694 = vmatprep.subr.bf16.mxu0 0
        %695 = vmatpush1.bf16.msra.mxu0 0
        %696 = vmatprep.subr.bf16.mxu0 0
        %697 = vmatpush1.bf16.msra.mxu0 0
        %698 = vmatprep.subr.bf16.mxu0 0
        %699 = vmatpush1.bf16.msra.mxu0 0
        %700 = vmatprep.subr.bf16.mxu0 0
        %701 = vmatpush1.bf16.msra.mxu0 0
        %702 = vmatprep.subr.bf16.mxu0 0
        %703 = vmatpush1.bf16.msra.mxu0 0
        %704 = vmatprep.subr.bf16.mxu0 0
        %705 = vmatpush1.bf16.msra.mxu0 0
        %706 = vmatprep.subr.bf16.mxu0 0
        %707 = vmatpush1.bf16.msra.mxu0 0
        %708 = vmatprep.mubr.bf16.mxu0 0
        %709 = vmatmul.mubr.bf16.gmra.mrb[0].mxu0 %v671
        %v710 = vpop.f32.mrb[0].mxu0
        %v711 = vadd.f32 0.0, %v710
        %v712 = vpop.f32.mrb[0].mxu0
        %v713 = vadd.f32 0.0, %v712
        %v714 = vpop.f32.mrb[0].mxu0
        %v715 = vadd.f32 0.0, %v714
        %v716 = vpop.f32.mrb[0].mxu0
        %v717 = vadd.f32 0.0, %v716
        %718 = vmatprep.mubr.bf16.mxu0 0
        %719 = vmatmul.mubr.bf16.gmra.mrb[0].mxu0 %v674
        %v720 = vpop.f32.mrb[0].mxu0
        %v721 = vadd.f32 0.0, %v720
        %v722 = vpop.f32.mrb[0].mxu0
        %v723 = vadd.f32 0.0, %v722
        %v724 = vpop.f32.mrb[0].mxu0
        %v725 = vadd.f32 0.0, %v724
        %v726 = vpop.f32.mrb[0].mxu0
        %v727 = vadd.f32 0.0, %v726
        %728 = vdwg.mxu0
        %729 = vmatprep.subr.bf16.mxu0 %v654
        %730 = vmatpush1.bf16.msra.mxu0 %v653
        %731 = vmatprep.subr.bf16.mxu0 %v658
        %732 = vmatpush1.bf16.msra.mxu0 %v657
        %733 = vmatprep.subr.bf16.mxu0 0
        %734 = vmatpush1.bf16.msra.mxu0 0
        %735 = vmatprep.subr.bf16.mxu0 0
        %736 = vmatpush1.bf16.msra.mxu0 0
        %737 = vmatprep.subr.bf16.mxu0 0
        %738 = vmatpush1.bf16.msra.mxu0 0
        %739 = vmatprep.subr.bf16.mxu0 0
        %740 = vmatpush1.bf16.msra.mxu0 0
        %741 = vmatprep.subr.bf16.mxu0 0
        %742 = vmatpush1.bf16.msra.mxu0 0
        %743 = vmatprep.subr.bf16.mxu0 0
        %744 = vmatpush1.bf16.msra.mxu0 0
        %745 = vmatprep.subr.bf16.mxu0 0
        %746 = vmatpush1.bf16.msra.mxu0 0
        %747 = vmatprep.subr.bf16.mxu0 0
        %748 = vmatpush1.bf16.msra.mxu0 0
        %749 = vmatprep.subr.bf16.mxu0 0
        %750 = vmatpush1.bf16.msra.mxu0 0
        %751 = vmatprep.subr.bf16.mxu0 0
        %752 = vmatpush1.bf16.msra.mxu0 0
        %753 = vmatprep.subr.bf16.mxu0 0
        %754 = vmatpush1.bf16.msra.mxu0 0
        %755 = vmatprep.subr.bf16.mxu0 0
        %756 = vmatpush1.bf16.msra.mxu0 0
        %757 = vmatprep.subr.bf16.mxu0 0
        %758 = vmatpush1.bf16.msra.mxu0 0
        %759 = vmatprep.subr.bf16.mxu0 0
        %760 = vmatpush1.bf16.msra.mxu0 0
        %761 = vmatprep.mubr.bf16.mxu0 0
        %762 = vmatmul.mubr.bf16.gmra.mrb[0].mxu0 %v671
        %v763 = vpop.f32.mrb[0].mxu0
        %v764 = vadd.f32 0.0, %v763
        %v765 = vpop.f32.mrb[0].mxu0
        %v766 = vadd.f32 0.0, %v765
        %v767 = vpop.f32.mrb[0].mxu0
        %v768 = vadd.f32 0.0, %v767
        %v769 = vpop.f32.mrb[0].mxu0
        %v770 = vadd.f32 0.0, %v769
        %771 = vmatprep.mubr.bf16.mxu0 0
        %772 = vmatmul.mubr.bf16.gmra.mrb[0].mxu0 %v674
        %v773 = vpop.f32.mrb[0].mxu0
        %v774 = vadd.f32 0.0, %v773
        %v775 = vpop.f32.mrb[0].mxu0
        %v776 = vadd.f32 0.0, %v775
        %v777 = vpop.f32.mrb[0].mxu0
        %v778 = vadd.f32 0.0, %v777
        %v779 = vpop.f32.mrb[0].mxu0
        %v780 = vadd.f32 0.0, %v779
        %781 = vdwg.mxu0
        %v782 = vadd.f32 %v711, %v713
        %v783 = vadd.f32 %v782, %v764
        %v784 = vadd.f32 %v783, %v766
        %785 = vadd.xlane.f32.xlu0 %v784
        %v786 = vpop.xlane.xlu0 %785
        %v787 = vadd.f32 %v715, %v717
        %v788 = vadd.f32 %v787, %v768
        %v789 = vadd.f32 %v788, %v770
        %790 = vadd.xlane.f32.xlu0 %v789
        %v791 = vpop.xlane.xlu0 %790
        %v792 = vadd.f32 %v721, %v723
        %v793 = vadd.f32 %v792, %v774
        %v794 = vadd.f32 %v793, %v776
        %795 = vadd.xlane.f32.xlu0 %v794
        %v796 = vpop.xlane.xlu0 %795
        %v797 = vadd.f32 %v725, %v727
        %v798 = vadd.f32 %v797, %v778
        %v799 = vadd.f32 %v798, %v780
        %800 = vadd.xlane.f32.xlu0 %v799
        %v801 = vpop.xlane.xlu0 %800
        %v802 = vmul.f32 %v711, %v711
        %v803 = vmul.f32 %v713, %v713
        %v804 = vmul.f32 %v764, %v764
        %v805 = vmul.f32 %v766, %v766
        %v806 = vmul.f32 %v715, %v715
        %v807 = vmul.f32 %v717, %v717
        %v808 = vmul.f32 %v768, %v768
        %v809 = vmul.f32 %v770, %v770
        %v810 = vmul.f32 %v721, %v721
        %v811 = vmul.f32 %v723, %v723
        %v812 = vmul.f32 %v774, %v774
        %v813 = vmul.f32 %v776, %v776
        %v814 = vmul.f32 %v725, %v725
        %v815 = vmul.f32 %v727, %v727
        %v816 = vmul.f32 %v778, %v778
        %v817 = vmul.f32 %v780, %v780
        %v818 = vadd.f32 %v802, %v803
        %v819 = vadd.f32 %v818, %v804
        %v820 = vadd.f32 %v819, %v805
        %821 = vadd.xlane.f32.xlu0 %v820
        %v822 = vpop.xlane.xlu0 %821
        %v823 = vadd.f32 %v806, %v807
        %v824 = vadd.f32 %v823, %v808
        %v825 = vadd.f32 %v824, %v809
        %826 = vadd.xlane.f32.xlu0 %v825
        %v827 = vpop.xlane.xlu0 %826
        %v828 = vadd.f32 %v810, %v811
        %v829 = vadd.f32 %v828, %v812
        %v830 = vadd.f32 %v829, %v813
        %831 = vadd.xlane.f32.xlu0 %v830
        %v832 = vpop.xlane.xlu0 %831
        %v833 = vadd.f32 %v814, %v815
        %v834 = vadd.f32 %v833, %v816
        %v835 = vadd.f32 %v834, %v817
        %836 = vadd.xlane.f32.xlu0 %v835
        %v837 = vpop.xlane.xlu0 %836
        %v838 = vmul.f32 %v786, 0.001953125
        %v839 = vmul.f32 %v791, 0.001953125
        %v840 = vmul.f32 %v796, 0.001953125
        %v841 = vmul.f32 %v801, 0.001953125
        %v842 = vmul.f32 %v822, 0.001953125
        %v843 = vmul.f32 %v827, 0.001953125
        %v844 = vmul.f32 %v832, 0.001953125
        %v845 = vmul.f32 %v837, 0.001953125
        %v846 = vmul.f32 %v838, %v838
        %v847 = vmul.f32 %v839, %v839
        %v848 = vmul.f32 %v840, %v840
        %v849 = vmul.f32 %v841, %v841
        %v850 = vsub.f32 %v842, %v846
        %v851 = vsub.f32 %v843, %v847
        %v852 = vsub.f32 %v844, %v848
        %v853 = vsub.f32 %v845, %v849
        %v854 = vmax.f32 %v850, 0.0
        %v855 = vmax.f32 %v851, 0.0
        %v856 = vmax.f32 %v852, 0.0
        %v857 = vmax.f32 %v853, 0.0
        %v858 = vadd.f32 %v854, 1e-05
        %v859 = vadd.f32 %v855, 1e-05
        %v860 = vadd.f32 %v856, 1e-05
        %v861 = vadd.f32 %v857, 1e-05
        %v862 = vrsqrt.pop %v858
        %v863 = vrsqrt.pop %v859
        %v864 = vrsqrt.pop %v860
        %v865 = vrsqrt.pop %v861
        %v866 = vsub.f32 %v711, %v838
        %v867 = vsub.f32 %v713, %v838
        %v868 = vsub.f32 %v764, %v838
        %v869 = vsub.f32 %v766, %v838
        %v870 = vsub.f32 %v715, %v839
        %v871 = vsub.f32 %v717, %v839
        %v872 = vsub.f32 %v768, %v839
        %v873 = vsub.f32 %v770, %v839
        %v874 = vsub.f32 %v721, %v840
        %v875 = vsub.f32 %v723, %v840
        %v876 = vsub.f32 %v774, %v840
        %v877 = vsub.f32 %v776, %v840
        %v878 = vsub.f32 %v725, %v841
        %v879 = vsub.f32 %v727, %v841
        %v880 = vsub.f32 %v778, %v841
        %v881 = vsub.f32 %v780, %v841
        %v882 = vmul.f32 %v866, %v862
        %v883 = vmul.f32 %v867, %v862
        %v884 = vmul.f32 %v868, %v862
        %v885 = vmul.f32 %v869, %v862
        %v886 = vmul.f32 %v870, %v863
        %v887 = vmul.f32 %v871, %v863
        %v888 = vmul.f32 %v872, %v863
        %v889 = vmul.f32 %v873, %v863
        %v890 = vmul.f32 %v874, %v864
        %v891 = vmul.f32 %v875, %v864
        %v892 = vmul.f32 %v876, %v864
        %v893 = vmul.f32 %v877, %v864
        %v894 = vmul.f32 %v878, %v865
        %v895 = vmul.f32 %v879, %v865
        %v896 = vmul.f32 %v880, %v865
        %v897 = vmul.f32 %v881, %v865
        %v898 = vpack.c.bf16 %v886, %v882
        %v899 = vpack.c.bf16 %v887, %v883
        %v900 = vpack.c.bf16 %v888, %v884
        %v901 = vpack.c.bf16 %v889, %v885
        %v902 = vpack.c.bf16 %v894, %v890
        %v903 = vpack.c.bf16 %v895, %v891
        %v904 = vpack.c.bf16 %v896, %v892
        %v905 = vpack.c.bf16 %v897, %v893
        %v906 = vld [vmem:[#allocation8] sm:$0x11]
        %v907 = vld [vmem:[#allocation8 + $0x8] sm:$0x11]
        %v908 = vld [vmem:[#allocation8] sm:$0x44]
        %v909 = vld [vmem:[#allocation8 + $0x8] sm:$0x44]
        %v912 = vunpack.c.l.b16 %v906
        %v913 = vunpack.c.h.b16 %v906
        %v914 = vunpack.c.l.b16 %v907
        %v915 = vunpack.c.h.b16 %v907
        %v916 = vpack.c.b16 %v912, %v912
        %v917 = vpack.c.b16 %v913, %v913
        %v918 = vpack.c.b16 %v914, %v914
        %v919 = vpack.c.b16 %v915, %v915
        %v921 = vshrl.u32 %v916, 16
        %v922 = vpack.i.b16 %v921, %v921
        %v924 = vlaneseq
        %v925 = vshrl.u32 %v924, 7
        %v926 = vsub.s32 0, %v925
        %v927 = vrot.slane %v922, %v926
        %v929 = vshrl.u32 %v917, 16
        %v930 = vpack.i.b16 %v929, %v929
        %v932 = vlaneseq
        %v933 = vshrl.u32 %v932, 7
        %v934 = vsub.s32 0, %v933
        %v935 = vrot.slane %v930, %v934
        %v937 = vshrl.u32 %v918, 16
        %v938 = vpack.i.b16 %v937, %v937
        %v940 = vlaneseq
        %v941 = vshrl.u32 %v940, 7
        %v942 = vsub.s32 0, %v941
        %v943 = vrot.slane %v938, %v942
        %v945 = vshrl.u32 %v919, 16
        %v946 = vpack.i.b16 %v945, %v945
        %v948 = vlaneseq
        %v949 = vshrl.u32 %v948, 7
        %v950 = vsub.s32 0, %v949
        %v951 = vrot.slane %v946, %v950
        %v952 = vmul.bf16 %v898, %v927
        %v953 = vmul.bf16 %v899, %v935
        %v954 = vmul.bf16 %v900, %v943
        %v955 = vmul.bf16 %v901, %v951
        %v956 = vmul.bf16 %v902, %v927
        %v957 = vmul.bf16 %v903, %v935
        %v958 = vmul.bf16 %v904, %v943
        %v959 = vmul.bf16 %v905, %v951
        %v962 = vunpack.c.l.b16 %v908
        %v963 = vunpack.c.h.b16 %v908
        %v964 = vunpack.c.l.b16 %v909
        %v965 = vunpack.c.h.b16 %v909
        %v966 = vpack.c.b16 %v962, %v962
        %v967 = vpack.c.b16 %v963, %v963
        %v968 = vpack.c.b16 %v964, %v964
        %v969 = vpack.c.b16 %v965, %v965
        %v971 = vshrl.u32 %v966, 16
        %v972 = vpack.i.b16 %v971, %v971
        %v974 = vlaneseq
        %v975 = vshrl.u32 %v974, 7
        %v976 = vsub.s32 2, %v975
        %v977 = vrot.slane %v972, %v976
        %v979 = vshrl.u32 %v967, 16
        %v980 = vpack.i.b16 %v979, %v979
        %v982 = vlaneseq
        %v983 = vshrl.u32 %v982, 7
        %v984 = vsub.s32 2, %v983
        %v985 = vrot.slane %v980, %v984
        %v987 = vshrl.u32 %v968, 16
        %v988 = vpack.i.b16 %v987, %v987
        %v990 = vlaneseq
        %v991 = vshrl.u32 %v990, 7
        %v992 = vsub.s32 2, %v991
        %v993 = vrot.slane %v988, %v992
        %v995 = vshrl.u32 %v969, 16
        %v996 = vpack.i.b16 %v995, %v995
        %v998 = vlaneseq
        %v999 = vshrl.u32 %v998, 7
        %v1000 = vsub.s32 2, %v999
        %v1001 = vrot.slane %v996, %v1000
        %v1002 = vadd.bf16 %v952, %v977
        %v1003 = vadd.bf16 %v953, %v985
        %v1004 = vadd.bf16 %v954, %v993
        %v1005 = vadd.bf16 %v955, %v1001
        %v1006 = vadd.bf16 %v956, %v977
        %v1007 = vadd.bf16 %v957, %v985
        %v1008 = vadd.bf16 %v958, %v993
        %v1009 = vadd.bf16 %v959, %v1001
        %v1010 = vmul.bf16 %v1002, 1009007652
        %v1011 = vmul.bf16 %v1003, 1009007652
        %v1012 = vmul.bf16 %v1004, 1009007652
        %v1013 = vmul.bf16 %v1005, 1009007652
        %v1014 = vmul.bf16 %v1006, 1009007652
        %v1015 = vmul.bf16 %v1007, 1009007652
        %v1016 = vmul.bf16 %v1008, 1009007652
        %v1017 = vmul.bf16 %v1009, 1009007652
        %v1018 = vmax.bf16 %v1002, %v1010
        %v1019 = vmax.bf16 %v1003, %v1011
        %v1020 = vmax.bf16 %v1004, %v1012
        %v1021 = vmax.bf16 %v1005, %v1013
        %v1022 = vmax.bf16 %v1006, %v1014
        %v1023 = vmax.bf16 %v1007, %v1015
        %v1024 = vmax.bf16 %v1008, %v1016
        %v1025 = vmax.bf16 %v1009, %v1017
        %1026 = vst [vmem:[#allocation2] sm:$0xff] %v1018
        %1027 = vst [vmem:[#allocation2 + $0x8] sm:$0xff] %v1019
        %1028 = vst [vmem:[#allocation2 + $0x10] sm:$0xff] %v1020
        %1029 = vst [vmem:[#allocation2 + $0x18] sm:$0xff] %v1021
        %1030 = vst [vmem:[#allocation2 + $0x20] sm:$0xff] %v1022
        %1031 = vst [vmem:[#allocation2 + $0x28] sm:$0xff] %v1023
        %1032 = vst [vmem:[#allocation2 + $0x30] sm:$0xff] %v1024
        %1033 = vst [vmem:[#allocation2 + $0x38] sm:$0xff] %v1025
        %v1034 = vld [vmem:[%s3] sm:$0xf]
        %v1035 = vld [vmem:[%s3 + $0x4] sm:$0xf]
        %v1036 = vld [vmem:[%s3 + $0x8] sm:$0xf]
        %v1037 = vld [vmem:[%s3 + $0xc] sm:$0xf]
        %v1038 = vld [vmem:[#allocation2] sm:$0xff]
        %v1039 = vld [vmem:[#allocation2 + $0x8] sm:$0xff]
        %v1040 = vld [vmem:[#allocation2 + $0x10] sm:$0xff]
        %v1041 = vld [vmem:[#allocation2 + $0x18] sm:$0xff]
        %v1042 = vld [vmem:[#allocation2 + $0x20] sm:$0xff]
        %v1043 = vld [vmem:[#allocation2 + $0x28] sm:$0xff]
        %v1044 = vld [vmem:[#allocation2 + $0x30] sm:$0xff]
        %v1045 = vld [vmem:[#allocation2 + $0x38] sm:$0xff]
        %v1050 = vunpack.c.l.b16 %v1034
        %v1051 = vunpack.c.l.b16 %v1035
        %v1052 = vunpack.c.l.b16 %v1036
        %v1053 = vunpack.c.l.b16 %v1037
        %v1054 = vpack.c.b16 %v1051, %v1050
        %v1055 = vpack.c.b16 %v1053, %v1052
        %v1057 = vsel %vm669, %v1054, 0
        %v1060 = vsel %vm669, %v1055, 0
        %1062 = vmatprep.subr.bf16.mxu0 %v1039
        %1063 = vmatpush1.bf16.msra.mxu0 %v1038
        %1064 = vmatprep.subr.bf16.mxu0 %v1043
        %1065 = vmatpush1.bf16.msra.mxu0 %v1042
        %1066 = vmatprep.subr.bf16.mxu0 0
        %1067 = vmatpush1.bf16.msra.mxu0 0
        %1068 = vmatprep.subr.bf16.mxu0 0
        %1069 = vmatpush1.bf16.msra.mxu0 0
        %1070 = vmatprep.subr.bf16.mxu0 0
        %1071 = vmatpush1.bf16.msra.mxu0 0
        %1072 = vmatprep.subr.bf16.mxu0 0
        %1073 = vmatpush1.bf16.msra.mxu0 0
        %1074 = vmatprep.subr.bf16.mxu0 0
        %1075 = vmatpush1.bf16.msra.mxu0 0
        %1076 = vmatprep.subr.bf16.mxu0 0
        %1077 = vmatpush1.bf16.msra.mxu0 0
        %1078 = vmatprep.subr.bf16.mxu0 0
        %1079 = vmatpush1.bf16.msra.mxu0 0
        %1080 = vmatprep.subr.bf16.mxu0 0
        %1081 = vmatpush1.bf16.msra.mxu0 0
        %1082 = vmatprep.subr.bf16.mxu0 0
        %1083 = vmatpush1.bf16.msra.mxu0 0
        %1084 = vmatprep.subr.bf16.mxu0 0
        %1085 = vmatpush1.bf16.msra.mxu0 0
        %1086 = vmatprep.subr.bf16.mxu0 0
        %1087 = vmatpush1.bf16.msra.mxu0 0
        %1088 = vmatprep.subr.bf16.mxu0 0
        %1089 = vmatpush1.bf16.msra.mxu0 0
        %1090 = vmatprep.subr.bf16.mxu0 0
        %1091 = vmatpush1.bf16.msra.mxu0 0
        %1092 = vmatprep.subr.bf16.mxu0 0
        %1093 = vmatpush1.bf16.msra.mxu0 0
        %1094 = vmatprep.mubr.bf16.mxu0 0
        %1095 = vmatmul.mubr.bf16.gmra.mrb[0].mxu0 %v1057
        %v1096 = vpop.f32.mrb[0].mxu0
        %v1097 = vadd.f32 0.0, %v1096
        %v1098 = vpop.f32.mrb[0].mxu0
        %v1099 = vadd.f32 0.0, %v1098
        %v1100 = vpop.f32.mrb[0].mxu0
        %v1101 = vadd.f32 0.0, %v1100
        %v1102 = vpop.f32.mrb[0].mxu0
        %v1103 = vadd.f32 0.0, %v1102
        %1104 = vmatprep.mubr.bf16.mxu0 0
        %1105 = vmatmul.mubr.bf16.gmra.mrb[0].mxu0 %v1060
        %v1106 = vpop.f32.mrb[0].mxu0
        %v1107 = vadd.f32 0.0, %v1106
        %v1108 = vpop.f32.mrb[0].mxu0
        %v1109 = vadd.f32 0.0, %v1108
        %v1110 = vpop.f32.mrb[0].mxu0
        %v1111 = vadd.f32 0.0, %v1110
        %v1112 = vpop.f32.mrb[0].mxu0
        %v1113 = vadd.f32 0.0, %v1112
        %1114 = vdwg.mxu0
        %1115 = vmatprep.subr.bf16.mxu0 %v1041
        %1116 = vmatpush1.bf16.msra.mxu0 %v1040
        %1117 = vmatprep.subr.bf16.mxu0 %v1045
        %1118 = vmatpush1.bf16.msra.mxu0 %v1044
        %1119 = vmatprep.subr.bf16.mxu0 0
        %1120 = vmatpush1.bf16.msra.mxu0 0
        %1121 = vmatprep.subr.bf16.mxu0 0
        %1122 = vmatpush1.bf16.msra.mxu0 0
        %1123 = vmatprep.subr.bf16.mxu0 0
        %1124 = vmatpush1.bf16.msra.mxu0 0
        %1125 = vmatprep.subr.bf16.mxu0 0
        %1126 = vmatpush1.bf16.msra.mxu0 0
        %1127 = vmatprep.subr.bf16.mxu0 0
        %1128 = vmatpush1.bf16.msra.mxu0 0
        %1129 = vmatprep.subr.bf16.mxu0 0
        %1130 = vmatpush1.bf16.msra.mxu0 0
        %1131 = vmatprep.subr.bf16.mxu0 0
        %1132 = vmatpush1.bf16.msra.mxu0 0
        %1133 = vmatprep.subr.bf16.mxu0 0
        %1134 = vmatpush1.bf16.msra.mxu0 0
        %1135 = vmatprep.subr.bf16.mxu0 0
        %1136 = vmatpush1.bf16.msra.mxu0 0
        %1137 = vmatprep.subr.bf16.mxu0 0
        %1138 = vmatpush1.bf16.msra.mxu0 0
        %1139 = vmatprep.subr.bf16.mxu0 0
        %1140 = vmatpush1.bf16.msra.mxu0 0
        %1141 = vmatprep.subr.bf16.mxu0 0
        %1142 = vmatpush1.bf16.msra.mxu0 0
        %1143 = vmatprep.subr.bf16.mxu0 0
        %1144 = vmatpush1.bf16.msra.mxu0 0
        %1145 = vmatprep.subr.bf16.mxu0 0
        %1146 = vmatpush1.bf16.msra.mxu0 0
        %1147 = vmatprep.mubr.bf16.mxu0 0
        %1148 = vmatmul.mubr.bf16.gmra.mrb[0].mxu0 %v1057
        %v1149 = vpop.f32.mrb[0].mxu0
        %v1150 = vadd.f32 0.0, %v1149
        %v1151 = vpop.f32.mrb[0].mxu0
        %v1152 = vadd.f32 0.0, %v1151
        %v1153 = vpop.f32.mrb[0].mxu0
        %v1154 = vadd.f32 0.0, %v1153
        %v1155 = vpop.f32.mrb[0].mxu0
        %v1156 = vadd.f32 0.0, %v1155
        %1157 = vmatprep.mubr.bf16.mxu0 0
        %1158 = vmatmul.mubr.bf16.gmra.mrb[0].mxu0 %v1060
        %v1159 = vpop.f32.mrb[0].mxu0
        %v1160 = vadd.f32 0.0, %v1159
        %v1161 = vpop.f32.mrb[0].mxu0
        %v1162 = vadd.f32 0.0, %v1161
        %v1163 = vpop.f32.mrb[0].mxu0
        %v1164 = vadd.f32 0.0, %v1163
        %v1165 = vpop.f32.mrb[0].mxu0
        %v1166 = vadd.f32 0.0, %v1165
        %1167 = vdwg.mxu0
        %v1168 = vadd.f32 %v1097, %v1099
        %v1169 = vadd.f32 %v1168, %v1150
        %v1170 = vadd.f32 %v1169, %v1152
        %1171 = vadd.xlane.f32.xlu0 %v1170
        %v1172 = vpop.xlane.xlu0 %1171
        %v1173 = vadd.f32 %v1101, %v1103
        %v1174 = vadd.f32 %v1173, %v1154
        %v1175 = vadd.f32 %v1174, %v1156
        %1176 = vadd.xlane.f32.xlu0 %v1175
        %v1177 = vpop.xlane.xlu0 %1176
        %v1178 = vadd.f32 %v1107, %v1109
        %v1179 = vadd.f32 %v1178, %v1160
        %v1180 = vadd.f32 %v1179, %v1162
        %1181 = vadd.xlane.f32.xlu0 %v1180
        %v1182 = vpop.xlane.xlu0 %1181
        %v1183 = vadd.f32 %v1111, %v1113
        %v1184 = vadd.f32 %v1183, %v1164
        %v1185 = vadd.f32 %v1184, %v1166
        %1186 = vadd.xlane.f32.xlu0 %v1185
        %v1187 = vpop.xlane.xlu0 %1186
        %v1188 = vmul.f32 %v1097, %v1097
        %v1189 = vmul.f32 %v1099, %v1099
        %v1190 = vmul.f32 %v1150, %v1150
        %v1191 = vmul.f32 %v1152, %v1152
        %v1192 = vmul.f32 %v1101, %v1101
        %v1193 = vmul.f32 %v1103, %v1103
        %v1194 = vmul.f32 %v1154, %v1154
        %v1195 = vmul.f32 %v1156, %v1156
        %v1196 = vmul.f32 %v1107, %v1107
        %v1197 = vmul.f32 %v1109, %v1109
        %v1198 = vmul.f32 %v1160, %v1160
        %v1199 = vmul.f32 %v1162, %v1162
        %v1200 = vmul.f32 %v1111, %v1111
        %v1201 = vmul.f32 %v1113, %v1113
        %v1202 = vmul.f32 %v1164, %v1164
        %v1203 = vmul.f32 %v1166, %v1166
        %v1204 = vadd.f32 %v1188, %v1189
        %v1205 = vadd.f32 %v1204, %v1190
        %v1206 = vadd.f32 %v1205, %v1191
        %1207 = vadd.xlane.f32.xlu0 %v1206
        %v1208 = vpop.xlane.xlu0 %1207
        %v1209 = vadd.f32 %v1192, %v1193
        %v1210 = vadd.f32 %v1209, %v1194
        %v1211 = vadd.f32 %v1210, %v1195
        %1212 = vadd.xlane.f32.xlu0 %v1211
        %v1213 = vpop.xlane.xlu0 %1212
        %v1214 = vadd.f32 %v1196, %v1197
        %v1215 = vadd.f32 %v1214, %v1198
        %v1216 = vadd.f32 %v1215, %v1199
        %1217 = vadd.xlane.f32.xlu0 %v1216
        %v1218 = vpop.xlane.xlu0 %1217
        %v1219 = vadd.f32 %v1200, %v1201
        %v1220 = vadd.f32 %v1219, %v1202
        %v1221 = vadd.f32 %v1220, %v1203
        %1222 = vadd.xlane.f32.xlu0 %v1221
        %v1223 = vpop.xlane.xlu0 %1222
        %v1224 = vmul.f32 %v1172, 0.001953125
        %v1225 = vmul.f32 %v1177, 0.001953125
        %v1226 = vmul.f32 %v1182, 0.001953125
        %v1227 = vmul.f32 %v1187, 0.001953125
        %v1228 = vmul.f32 %v1208, 0.001953125
        %v1229 = vmul.f32 %v1213, 0.001953125
        %v1230 = vmul.f32 %v1218, 0.001953125
        %v1231 = vmul.f32 %v1223, 0.001953125
        %v1232 = vmul.f32 %v1224, %v1224
        %v1233 = vmul.f32 %v1225, %v1225
        %v1234 = vmul.f32 %v1226, %v1226
        %v1235 = vmul.f32 %v1227, %v1227
        %v1236 = vsub.f32 %v1228, %v1232
        %v1237 = vsub.f32 %v1229, %v1233
        %v1238 = vsub.f32 %v1230, %v1234
        %v1239 = vsub.f32 %v1231, %v1235
        %v1240 = vmax.f32 %v1236, 0.0
        %v1241 = vmax.f32 %v1237, 0.0
        %v1242 = vmax.f32 %v1238, 0.0
        %v1243 = vmax.f32 %v1239, 0.0
        %v1244 = vadd.f32 %v1240, 1e-05
        %v1245 = vadd.f32 %v1241, 1e-05
        %v1246 = vadd.f32 %v1242, 1e-05
        %v1247 = vadd.f32 %v1243, 1e-05
        %v1248 = vrsqrt.pop %v1244
        %v1249 = vrsqrt.pop %v1245
        %v1250 = vrsqrt.pop %v1246
        %v1251 = vrsqrt.pop %v1247
        %v1252 = vsub.f32 %v1097, %v1224
        %v1253 = vsub.f32 %v1099, %v1224
        %v1254 = vsub.f32 %v1150, %v1224
        %v1255 = vsub.f32 %v1152, %v1224
        %v1256 = vsub.f32 %v1101, %v1225
        %v1257 = vsub.f32 %v1103, %v1225
        %v1258 = vsub.f32 %v1154, %v1225
        %v1259 = vsub.f32 %v1156, %v1225
        %v1260 = vsub.f32 %v1107, %v1226
        %v1261 = vsub.f32 %v1109, %v1226
        %v1262 = vsub.f32 %v1160, %v1226
        %v1263 = vsub.f32 %v1162, %v1226
        %v1264 = vsub.f32 %v1111, %v1227
        %v1265 = vsub.f32 %v1113, %v1227
        %v1266 = vsub.f32 %v1164, %v1227
        %v1267 = vsub.f32 %v1166, %v1227
        %v1268 = vmul.f32 %v1252, %v1248
        %v1269 = vmul.f32 %v1253, %v1248
        %v1270 = vmul.f32 %v1254, %v1248
        %v1271 = vmul.f32 %v1255, %v1248
        %v1272 = vmul.f32 %v1256, %v1249
        %v1273 = vmul.f32 %v1257, %v1249
        %v1274 = vmul.f32 %v1258, %v1249
        %v1275 = vmul.f32 %v1259, %v1249
        %v1276 = vmul.f32 %v1260, %v1250
        %v1277 = vmul.f32 %v1261, %v1250
        %v1278 = vmul.f32 %v1262, %v1250
        %v1279 = vmul.f32 %v1263, %v1250
        %v1280 = vmul.f32 %v1264, %v1251
        %v1281 = vmul.f32 %v1265, %v1251
        %v1282 = vmul.f32 %v1266, %v1251
        %v1283 = vmul.f32 %v1267, %v1251
        %v1284 = vpack.c.bf16 %v1272, %v1268
        %v1285 = vpack.c.bf16 %v1273, %v1269
        %v1286 = vpack.c.bf16 %v1274, %v1270
        %v1287 = vpack.c.bf16 %v1275, %v1271
        %v1288 = vpack.c.bf16 %v1280, %v1276
        %v1289 = vpack.c.bf16 %v1281, %v1277
        %v1290 = vpack.c.bf16 %v1282, %v1278
        %v1291 = vpack.c.bf16 %v1283, %v1279
        %v1292 = vld [vmem:[#allocation8] sm:$0x22]
        %v1293 = vld [vmem:[#allocation8 + $0x8] sm:$0x22]
        %v1294 = vld [vmem:[#allocation8] sm:$0x88]
        %v1295 = vld [vmem:[#allocation8 + $0x8] sm:$0x88]
        %v1298 = vunpack.c.l.b16 %v1292
        %v1299 = vunpack.c.h.b16 %v1292
        %v1300 = vunpack.c.l.b16 %v1293
        %v1301 = vunpack.c.h.b16 %v1293
        %v1302 = vpack.c.b16 %v1298, %v1298
        %v1303 = vpack.c.b16 %v1299, %v1299
        %v1304 = vpack.c.b16 %v1300, %v1300
        %v1305 = vpack.c.b16 %v1301, %v1301
        %v1307 = vpack.i.b16 %v1302, %v1302
        %v1309 = vlaneseq
        %v1310 = vshrl.u32 %v1309, 7
        %v1311 = vsub.s32 1, %v1310
        %v1312 = vrot.slane %v1307, %v1311
        %v1314 = vpack.i.b16 %v1303, %v1303
        %v1316 = vlaneseq
        %v1317 = vshrl.u32 %v1316, 7
        %v1318 = vsub.s32 1, %v1317
        %v1319 = vrot.slane %v1314, %v1318
        %v1321 = vpack.i.b16 %v1304, %v1304
        %v1323 = vlaneseq
        %v1324 = vshrl.u32 %v1323, 7
        %v1325 = vsub.s32 1, %v1324
        %v1326 = vrot.slane %v1321, %v1325
        %v1328 = vpack.i.b16 %v1305, %v1305
        %v1330 = vlaneseq
        %v1331 = vshrl.u32 %v1330, 7
        %v1332 = vsub.s32 1, %v1331
        %v1333 = vrot.slane %v1328, %v1332
        %v1334 = vmul.bf16 %v1284, %v1312
        %v1335 = vmul.bf16 %v1285, %v1319
        %v1336 = vmul.bf16 %v1286, %v1326
        %v1337 = vmul.bf16 %v1287, %v1333
        %v1338 = vmul.bf16 %v1288, %v1312
        %v1339 = vmul.bf16 %v1289, %v1319
        %v1340 = vmul.bf16 %v1290, %v1326
        %v1341 = vmul.bf16 %v1291, %v1333
        %v1344 = vunpack.c.l.b16 %v1294
        %v1345 = vunpack.c.h.b16 %v1294
        %v1346 = vunpack.c.l.b16 %v1295
        %v1347 = vunpack.c.h.b16 %v1295
        %v1348 = vpack.c.b16 %v1344, %v1344
        %v1349 = vpack.c.b16 %v1345, %v1345
        %v1350 = vpack.c.b16 %v1346, %v1346
        %v1351 = vpack.c.b16 %v1347, %v1347
        %v1353 = vpack.i.b16 %v1348, %v1348
        %v1355 = vlaneseq
        %v1356 = vshrl.u32 %v1355, 7
        %v1357 = vsub.s32 3, %v1356
        %v1358 = vrot.slane %v1353, %v1357
        %v1360 = vpack.i.b16 %v1349, %v1349
        %v1362 = vlaneseq
        %v1363 = vshrl.u32 %v1362, 7
        %v1364 = vsub.s32 3, %v1363
        %v1365 = vrot.slane %v1360, %v1364
        %v1367 = vpack.i.b16 %v1350, %v1350
        %v1369 = vlaneseq
        %v1370 = vshrl.u32 %v1369, 7
        %v1371 = vsub.s32 3, %v1370
        %v1372 = vrot.slane %v1367, %v1371
        %v1374 = vpack.i.b16 %v1351, %v1351
        %v1376 = vlaneseq
        %v1377 = vshrl.u32 %v1376, 7
        %v1378 = vsub.s32 3, %v1377
        %v1379 = vrot.slane %v1374, %v1378
        %v1380 = vadd.bf16 %v1334, %v1358
        %v1381 = vadd.bf16 %v1335, %v1365
        %v1382 = vadd.bf16 %v1336, %v1372
        %v1383 = vadd.bf16 %v1337, %v1379
        %v1384 = vadd.bf16 %v1338, %v1358
        %v1385 = vadd.bf16 %v1339, %v1365
        %v1386 = vadd.bf16 %v1340, %v1372
        %v1387 = vadd.bf16 %v1341, %v1379
        %v1388 = vmul.bf16 %v1380, 1009007652
        %v1389 = vmul.bf16 %v1381, 1009007652
        %v1390 = vmul.bf16 %v1382, 1009007652
        %v1391 = vmul.bf16 %v1383, 1009007652
        %v1392 = vmul.bf16 %v1384, 1009007652
        %v1393 = vmul.bf16 %v1385, 1009007652
        %v1394 = vmul.bf16 %v1386, 1009007652
        %v1395 = vmul.bf16 %v1387, 1009007652
        %v1396 = vmax.bf16 %v1380, %v1388
        %v1397 = vmax.bf16 %v1381, %v1389
        %v1398 = vmax.bf16 %v1382, %v1390
        %v1399 = vmax.bf16 %v1383, %v1391
        %v1400 = vmax.bf16 %v1384, %v1392
        %v1401 = vmax.bf16 %v1385, %v1393
        %v1402 = vmax.bf16 %v1386, %v1394
        %v1403 = vmax.bf16 %v1387, %v1395
        %1404 = vst [vmem:[#allocation2] sm:$0xff] %v1396
        %1405 = vst [vmem:[#allocation2 + $0x8] sm:$0xff] %v1397
        %1406 = vst [vmem:[#allocation2 + $0x10] sm:$0xff] %v1398
        %1407 = vst [vmem:[#allocation2 + $0x18] sm:$0xff] %v1399
        %1408 = vst [vmem:[#allocation2 + $0x20] sm:$0xff] %v1400
        %1409 = vst [vmem:[#allocation2 + $0x28] sm:$0xff] %v1401
        %1410 = vst [vmem:[#allocation2 + $0x30] sm:$0xff] %v1402
        %1411 = vst [vmem:[#allocation2 + $0x38] sm:$0xff] %v1403
        %v1412 = vld [vmem:[%s4] sm:$0xf]
        %v1413 = vld [vmem:[%s4 + $0x4] sm:$0xf]
        %v1414 = vld [vmem:[%s4 + $0x8] sm:$0xf]
        %v1415 = vld [vmem:[%s4 + $0xc] sm:$0xf]
        %v1416 = vld [vmem:[#allocation2] sm:$0xff]
        %v1417 = vld [vmem:[#allocation2 + $0x8] sm:$0xff]
        %v1418 = vld [vmem:[#allocation2 + $0x10] sm:$0xff]
        %v1419 = vld [vmem:[#allocation2 + $0x18] sm:$0xff]
        %v1420 = vld [vmem:[#allocation2 + $0x20] sm:$0xff]
        %v1421 = vld [vmem:[#allocation2 + $0x28] sm:$0xff]
        %v1422 = vld [vmem:[#allocation2 + $0x30] sm:$0xff]
        %v1423 = vld [vmem:[#allocation2 + $0x38] sm:$0xff]
        %v1428 = vunpack.c.l.b16 %v1412
        %v1429 = vunpack.c.l.b16 %v1413
        %v1430 = vunpack.c.l.b16 %v1414
        %v1431 = vunpack.c.l.b16 %v1415
        %v1432 = vpack.c.b16 %v1429, %v1428
        %v1433 = vpack.c.b16 %v1431, %v1430
        %v1435 = vsel %vm669, %v1432, 0
        %v1438 = vsel %vm669, %v1433, 0
        %1440 = vmatprep.subr.bf16.mxu0 %v1417
        %1441 = vmatpush1.bf16.msra.mxu0 %v1416
        %1442 = vmatprep.subr.bf16.mxu0 %v1421
        %1443 = vmatpush1.bf16.msra.mxu0 %v1420
        %1444 = vmatprep.subr.bf16.mxu0 0
        %1445 = vmatpush1.bf16.msra.mxu0 0
        %1446 = vmatprep.subr.bf16.mxu0 0
        %1447 = vmatpush1.bf16.msra.mxu0 0
        %1448 = vmatprep.subr.bf16.mxu0 0
        %1449 = vmatpush1.bf16.msra.mxu0 0
        %1450 = vmatprep.subr.bf16.mxu0 0
        %1451 = vmatpush1.bf16.msra.mxu0 0
        %1452 = vmatprep.subr.bf16.mxu0 0
        %1453 = vmatpush1.bf16.msra.mxu0 0
        %1454 = vmatprep.subr.bf16.mxu0 0
        %1455 = vmatpush1.bf16.msra.mxu0 0
        %1456 = vmatprep.subr.bf16.mxu0 0
        %1457 = vmatpush1.bf16.msra.mxu0 0
        %1458 = vmatprep.subr.bf16.mxu0 0
        %1459 = vmatpush1.bf16.msra.mxu0 0
        %1460 = vmatprep.subr.bf16.mxu0 0
        %1461 = vmatpush1.bf16.msra.mxu0 0
        %1462 = vmatprep.subr.bf16.mxu0 0
        %1463 = vmatpush1.bf16.msra.mxu0 0
        %1464 = vmatprep.subr.bf16.mxu0 0
        %1465 = vmatpush1.bf16.msra.mxu0 0
        %1466 = vmatprep.subr.bf16.mxu0 0
        %1467 = vmatpush1.bf16.msra.mxu0 0
        %1468 = vmatprep.subr.bf16.mxu0 0
        %1469 = vmatpush1.bf16.msra.mxu0 0
        %1470 = vmatprep.subr.bf16.mxu0 0
        %1471 = vmatpush1.bf16.msra.mxu0 0
        %1472 = vmatprep.mubr.bf16.mxu0 0
        %1473 = vmatmul.mubr.bf16.gmra.mrb[0].mxu0 %v1435
        %v1474 = vpop.f32.mrb[0].mxu0
        %v1475 = vadd.f32 0.0, %v1474
        %v1476 = vpop.f32.mrb[0].mxu0
        %v1477 = vadd.f32 0.0, %v1476
        %v1478 = vpop.f32.mrb[0].mxu0
        %v1479 = vadd.f32 0.0, %v1478
        %v1480 = vpop.f32.mrb[0].mxu0
        %v1481 = vadd.f32 0.0, %v1480
        %1482 = vmatprep.mubr.bf16.mxu0 0
        %1483 = vmatmul.mubr.bf16.gmra.mrb[0].mxu0 %v1438
        %v1484 = vpop.f32.mrb[0].mxu0
        %v1485 = vadd.f32 0.0, %v1484
        %v1486 = vpop.f32.mrb[0].mxu0
        %v1487 = vadd.f32 0.0, %v1486
        %v1488 = vpop.f32.mrb[0].mxu0
        %v1489 = vadd.f32 0.0, %v1488
        %v1490 = vpop.f32.mrb[0].mxu0
        %v1491 = vadd.f32 0.0, %v1490
        %1492 = vdwg.mxu0
        %1493 = vmatprep.subr.bf16.mxu0 %v1419
        %1494 = vmatpush1.bf16.msra.mxu0 %v1418
        %1495 = vmatprep.subr.bf16.mxu0 %v1423
        %1496 = vmatpush1.bf16.msra.mxu0 %v1422
        %1497 = vmatprep.subr.bf16.mxu0 0
        %1498 = vmatpush1.bf16.msra.mxu0 0
        %1499 = vmatprep.subr.bf16.mxu0 0
        %1500 = vmatpush1.bf16.msra.mxu0 0
        %1501 = vmatprep.subr.bf16.mxu0 0
        %1502 = vmatpush1.bf16.msra.mxu0 0
        %1503 = vmatprep.subr.bf16.mxu0 0
        %1504 = vmatpush1.bf16.msra.mxu0 0
        %1505 = vmatprep.subr.bf16.mxu0 0
        %1506 = vmatpush1.bf16.msra.mxu0 0
        %1507 = vmatprep.subr.bf16.mxu0 0
        %1508 = vmatpush1.bf16.msra.mxu0 0
        %1509 = vmatprep.subr.bf16.mxu0 0
        %1510 = vmatpush1.bf16.msra.mxu0 0
        %1511 = vmatprep.subr.bf16.mxu0 0
        %1512 = vmatpush1.bf16.msra.mxu0 0
        %1513 = vmatprep.subr.bf16.mxu0 0
        %1514 = vmatpush1.bf16.msra.mxu0 0
        %1515 = vmatprep.subr.bf16.mxu0 0
        %1516 = vmatpush1.bf16.msra.mxu0 0
        %1517 = vmatprep.subr.bf16.mxu0 0
        %1518 = vmatpush1.bf16.msra.mxu0 0
        %1519 = vmatprep.subr.bf16.mxu0 0
        %1520 = vmatpush1.bf16.msra.mxu0 0
        %1521 = vmatprep.subr.bf16.mxu0 0
        %1522 = vmatpush1.bf16.msra.mxu0 0
        %1523 = vmatprep.subr.bf16.mxu0 0
        %1524 = vmatpush1.bf16.msra.mxu0 0
        %1525 = vmatprep.mubr.bf16.mxu0 0
        %1526 = vmatmul.mubr.bf16.gmra.mrb[0].mxu0 %v1435
        %v1527 = vpop.f32.mrb[0].mxu0
        %v1528 = vadd.f32 0.0, %v1527
        %v1529 = vpop.f32.mrb[0].mxu0
        %v1530 = vadd.f32 0.0, %v1529
        %v1531 = vpop.f32.mrb[0].mxu0
        %v1532 = vadd.f32 0.0, %v1531
        %v1533 = vpop.f32.mrb[0].mxu0
        %v1534 = vadd.f32 0.0, %v1533
        %1535 = vmatprep.mubr.bf16.mxu0 0
        %1536 = vmatmul.mubr.bf16.gmra.mrb[0].mxu0 %v1438
        %v1537 = vpop.f32.mrb[0].mxu0
        %v1538 = vadd.f32 0.0, %v1537
        %v1539 = vpop.f32.mrb[0].mxu0
        %v1540 = vadd.f32 0.0, %v1539
        %v1541 = vpop.f32.mrb[0].mxu0
        %v1542 = vadd.f32 0.0, %v1541
        %v1543 = vpop.f32.mrb[0].mxu0
        %v1544 = vadd.f32 0.0, %v1543
        %1545 = vdwg.mxu0
        %v1546 = vadd.f32 %v1475, %v1477
        %v1547 = vadd.f32 %v1546, %v1528
        %v1548 = vadd.f32 %v1547, %v1530
        %1549 = vadd.xlane.f32.xlu0 %v1548
        %v1550 = vpop.xlane.xlu0 %1549
        %v1551 = vadd.f32 %v1479, %v1481
        %v1552 = vadd.f32 %v1551, %v1532
        %v1553 = vadd.f32 %v1552, %v1534
        %1554 = vadd.xlane.f32.xlu0 %v1553
        %v1555 = vpop.xlane.xlu0 %1554
        %v1556 = vadd.f32 %v1485, %v1487
        %v1557 = vadd.f32 %v1556, %v1538
        %v1558 = vadd.f32 %v1557, %v1540
        %1559 = vadd.xlane.f32.xlu0 %v1558
        %v1560 = vpop.xlane.xlu0 %1559
        %v1561 = vadd.f32 %v1489, %v1491
        %v1562 = vadd.f32 %v1561, %v1542
        %v1563 = vadd.f32 %v1562, %v1544
        %1564 = vadd.xlane.f32.xlu0 %v1563
        %v1565 = vpop.xlane.xlu0 %1564
        %v1566 = vmul.f32 %v1475, %v1475
        %v1567 = vmul.f32 %v1477, %v1477
        %v1568 = vmul.f32 %v1528, %v1528
        %v1569 = vmul.f32 %v1530, %v1530
        %v1570 = vmul.f32 %v1479, %v1479
        %v1571 = vmul.f32 %v1481, %v1481
        %v1572 = vmul.f32 %v1532, %v1532
        %v1573 = vmul.f32 %v1534, %v1534
        %v1574 = vmul.f32 %v1485, %v1485
        %v1575 = vmul.f32 %v1487, %v1487
        %v1576 = vmul.f32 %v1538, %v1538
        %v1577 = vmul.f32 %v1540, %v1540
        %v1578 = vmul.f32 %v1489, %v1489
        %v1579 = vmul.f32 %v1491, %v1491
        %v1580 = vmul.f32 %v1542, %v1542
        %v1581 = vmul.f32 %v1544, %v1544
        %v1582 = vadd.f32 %v1566, %v1567
        %v1583 = vadd.f32 %v1582, %v1568
        %v1584 = vadd.f32 %v1583, %v1569
        %1585 = vadd.xlane.f32.xlu0 %v1584
        %v1586 = vpop.xlane.xlu0 %1585
        %v1587 = vadd.f32 %v1570, %v1571
        %v1588 = vadd.f32 %v1587, %v1572
        %v1589 = vadd.f32 %v1588, %v1573
        %1590 = vadd.xlane.f32.xlu0 %v1589
        %v1591 = vpop.xlane.xlu0 %1590
        %v1592 = vadd.f32 %v1574, %v1575
        %v1593 = vadd.f32 %v1592, %v1576
        %v1594 = vadd.f32 %v1593, %v1577
        %1595 = vadd.xlane.f32.xlu0 %v1594
        %v1596 = vpop.xlane.xlu0 %1595
        %v1597 = vadd.f32 %v1578, %v1579
        %v1598 = vadd.f32 %v1597, %v1580
        %v1599 = vadd.f32 %v1598, %v1581
        %1600 = vadd.xlane.f32.xlu0 %v1599
        %v1601 = vpop.xlane.xlu0 %1600
        %v1602 = vmul.f32 %v1550, 0.001953125
        %v1603 = vmul.f32 %v1555, 0.001953125
        %v1604 = vmul.f32 %v1560, 0.001953125
        %v1605 = vmul.f32 %v1565, 0.001953125
        %v1606 = vmul.f32 %v1586, 0.001953125
        %v1607 = vmul.f32 %v1591, 0.001953125
        %v1608 = vmul.f32 %v1596, 0.001953125
        %v1609 = vmul.f32 %v1601, 0.001953125
        %v1610 = vmul.f32 %v1602, %v1602
        %v1611 = vmul.f32 %v1603, %v1603
        %v1612 = vmul.f32 %v1604, %v1604
        %v1613 = vmul.f32 %v1605, %v1605
        %v1614 = vsub.f32 %v1606, %v1610
        %v1615 = vsub.f32 %v1607, %v1611
        %v1616 = vsub.f32 %v1608, %v1612
        %v1617 = vsub.f32 %v1609, %v1613
        %v1618 = vmax.f32 %v1614, 0.0
        %v1619 = vmax.f32 %v1615, 0.0
        %v1620 = vmax.f32 %v1616, 0.0
        %v1621 = vmax.f32 %v1617, 0.0
        %v1622 = vadd.f32 %v1618, 1e-05
        %v1623 = vadd.f32 %v1619, 1e-05
        %v1624 = vadd.f32 %v1620, 1e-05
        %v1625 = vadd.f32 %v1621, 1e-05
        %v1626 = vrsqrt.pop %v1622
        %v1627 = vrsqrt.pop %v1623
        %v1628 = vrsqrt.pop %v1624
        %v1629 = vrsqrt.pop %v1625
        %v1630 = vsub.f32 %v1475, %v1602
        %v1631 = vsub.f32 %v1477, %v1602
        %v1632 = vsub.f32 %v1528, %v1602
        %v1633 = vsub.f32 %v1530, %v1602
        %v1634 = vsub.f32 %v1479, %v1603
        %v1635 = vsub.f32 %v1481, %v1603
        %v1636 = vsub.f32 %v1532, %v1603
        %v1637 = vsub.f32 %v1534, %v1603
        %v1638 = vsub.f32 %v1485, %v1604
        %v1639 = vsub.f32 %v1487, %v1604
        %v1640 = vsub.f32 %v1538, %v1604
        %v1641 = vsub.f32 %v1540, %v1604
        %v1642 = vsub.f32 %v1489, %v1605
        %v1643 = vsub.f32 %v1491, %v1605
        %v1644 = vsub.f32 %v1542, %v1605
        %v1645 = vsub.f32 %v1544, %v1605
        %v1646 = vmul.f32 %v1630, %v1626
        %v1647 = vmul.f32 %v1631, %v1626
        %v1648 = vmul.f32 %v1632, %v1626
        %v1649 = vmul.f32 %v1633, %v1626
        %v1650 = vmul.f32 %v1634, %v1627
        %v1651 = vmul.f32 %v1635, %v1627
        %v1652 = vmul.f32 %v1636, %v1627
        %v1653 = vmul.f32 %v1637, %v1627
        %v1654 = vmul.f32 %v1638, %v1628
        %v1655 = vmul.f32 %v1639, %v1628
        %v1656 = vmul.f32 %v1640, %v1628
        %v1657 = vmul.f32 %v1641, %v1628
        %v1658 = vmul.f32 %v1642, %v1629
        %v1659 = vmul.f32 %v1643, %v1629
        %v1660 = vmul.f32 %v1644, %v1629
        %v1661 = vmul.f32 %v1645, %v1629
        %v1662 = vpack.c.bf16 %v1650, %v1646
        %v1663 = vpack.c.bf16 %v1651, %v1647
        %v1664 = vpack.c.bf16 %v1652, %v1648
        %v1665 = vpack.c.bf16 %v1653, %v1649
        %v1666 = vpack.c.bf16 %v1658, %v1654
        %v1667 = vpack.c.bf16 %v1659, %v1655
        %v1668 = vpack.c.bf16 %v1660, %v1656
        %v1669 = vpack.c.bf16 %v1661, %v1657
        %v1670 = vld [vmem:[#allocation8] sm:$0x22]
        %v1671 = vld [vmem:[#allocation8 + $0x8] sm:$0x22]
        %v1672 = vld [vmem:[#allocation8] sm:$0x88]
        %v1673 = vld [vmem:[#allocation8 + $0x8] sm:$0x88]
        %v1676 = vunpack.c.l.b16 %v1670
        %v1677 = vunpack.c.h.b16 %v1670
        %v1678 = vunpack.c.l.b16 %v1671
        %v1679 = vunpack.c.h.b16 %v1671
        %v1680 = vpack.c.b16 %v1676, %v1676
        %v1681 = vpack.c.b16 %v1677, %v1677
        %v1682 = vpack.c.b16 %v1678, %v1678
        %v1683 = vpack.c.b16 %v1679, %v1679
        %v1685 = vshrl.u32 %v1680, 16
        %v1686 = vpack.i.b16 %v1685, %v1685
        %v1688 = vlaneseq
        %v1689 = vshrl.u32 %v1688, 7
        %v1690 = vsub.s32 1, %v1689
        %v1691 = vrot.slane %v1686, %v1690
        %v1693 = vshrl.u32 %v1681, 16
        %v1694 = vpack.i.b16 %v1693, %v1693
        %v1696 = vlaneseq
        %v1697 = vshrl.u32 %v1696, 7
        %v1698 = vsub.s32 1, %v1697
        %v1699 = vrot.slane %v1694, %v1698
        %v1701 = vshrl.u32 %v1682, 16
        %v1702 = vpack.i.b16 %v1701, %v1701
        %v1704 = vlaneseq
        %v1705 = vshrl.u32 %v1704, 7
        %v1706 = vsub.s32 1, %v1705
        %v1707 = vrot.slane %v1702, %v1706
        %v1709 = vshrl.u32 %v1683, 16
        %v1710 = vpack.i.b16 %v1709, %v1709
        %v1712 = vlaneseq
        %v1713 = vshrl.u32 %v1712, 7
        %v1714 = vsub.s32 1, %v1713
        %v1715 = vrot.slane %v1710, %v1714
        %v1716 = vmul.bf16 %v1662, %v1691
        %v1717 = vmul.bf16 %v1663, %v1699
        %v1718 = vmul.bf16 %v1664, %v1707
        %v1719 = vmul.bf16 %v1665, %v1715
        %v1720 = vmul.bf16 %v1666, %v1691
        %v1721 = vmul.bf16 %v1667, %v1699
        %v1722 = vmul.bf16 %v1668, %v1707
        %v1723 = vmul.bf16 %v1669, %v1715
        %v1726 = vunpack.c.l.b16 %v1672
        %v1727 = vunpack.c.h.b16 %v1672
        %v1728 = vunpack.c.l.b16 %v1673
        %v1729 = vunpack.c.h.b16 %v1673
        %v1730 = vpack.c.b16 %v1726, %v1726
        %v1731 = vpack.c.b16 %v1727, %v1727
        %v1732 = vpack.c.b16 %v1728, %v1728
        %v1733 = vpack.c.b16 %v1729, %v1729
        %v1735 = vshrl.u32 %v1730, 16
        %v1736 = vpack.i.b16 %v1735, %v1735
        %v1738 = vlaneseq
        %v1739 = vshrl.u32 %v1738, 7
        %v1740 = vsub.s32 3, %v1739
        %v1741 = vrot.slane %v1736, %v1740
        %v1743 = vshrl.u32 %v1731, 16
        %v1744 = vpack.i.b16 %v1743, %v1743
        %v1746 = vlaneseq
        %v1747 = vshrl.u32 %v1746, 7
        %v1748 = vsub.s32 3, %v1747
        %v1749 = vrot.slane %v1744, %v1748
        %v1751 = vshrl.u32 %v1732, 16
        %v1752 = vpack.i.b16 %v1751, %v1751
        %v1754 = vlaneseq
        %v1755 = vshrl.u32 %v1754, 7
        %v1756 = vsub.s32 3, %v1755
        %v1757 = vrot.slane %v1752, %v1756
        %v1759 = vshrl.u32 %v1733, 16
        %v1760 = vpack.i.b16 %v1759, %v1759
        %v1762 = vlaneseq
        %v1763 = vshrl.u32 %v1762, 7
        %v1764 = vsub.s32 3, %v1763
        %v1765 = vrot.slane %v1760, %v1764
        %v1766 = vadd.bf16 %v1716, %v1741
        %v1767 = vadd.bf16 %v1717, %v1749
        %v1768 = vadd.bf16 %v1718, %v1757
        %v1769 = vadd.bf16 %v1719, %v1765
        %v1770 = vadd.bf16 %v1720, %v1741
        %v1771 = vadd.bf16 %v1721, %v1749
        %v1772 = vadd.bf16 %v1722, %v1757
        %v1773 = vadd.bf16 %v1723, %v1765
        %v1774 = vmul.bf16 %v1766, 1009007652
        %v1775 = vmul.bf16 %v1767, 1009007652
        %v1776 = vmul.bf16 %v1768, 1009007652
        %v1777 = vmul.bf16 %v1769, 1009007652
        %v1778 = vmul.bf16 %v1770, 1009007652
        %v1779 = vmul.bf16 %v1771, 1009007652
        %v1780 = vmul.bf16 %v1772, 1009007652
        %v1781 = vmul.bf16 %v1773, 1009007652
        %v1782 = vmax.bf16 %v1766, %v1774
        %v1783 = vmax.bf16 %v1767, %v1775
        %v1784 = vmax.bf16 %v1768, %v1776
        %v1785 = vmax.bf16 %v1769, %v1777
        %v1786 = vmax.bf16 %v1770, %v1778
        %v1787 = vmax.bf16 %v1771, %v1779
        %v1788 = vmax.bf16 %v1772, %v1780
        %v1789 = vmax.bf16 %v1773, %v1781
        %1790 = vst [vmem:[#allocation2] sm:$0xff] %v1782
        %1791 = vst [vmem:[#allocation2 + $0x8] sm:$0xff] %v1783
        %1792 = vst [vmem:[#allocation2 + $0x10] sm:$0xff] %v1784
        %1793 = vst [vmem:[#allocation2 + $0x18] sm:$0xff] %v1785
        %1794 = vst [vmem:[#allocation2 + $0x20] sm:$0xff] %v1786
        %1795 = vst [vmem:[#allocation2 + $0x28] sm:$0xff] %v1787
        %1796 = vst [vmem:[#allocation2 + $0x30] sm:$0xff] %v1788
        %1797 = vst [vmem:[#allocation2 + $0x38] sm:$0xff] %v1789
        %v1798 = vld [vmem:[#allocation6] sm:$0xf]
        %v1799 = vld [vmem:[#allocation6 + $0x4] sm:$0xf]
        %v1800 = vld [vmem:[#allocation6 + $0x8] sm:$0xf]
        %v1801 = vld [vmem:[#allocation6 + $0xc] sm:$0xf]
        %v1802 = vld [vmem:[#allocation2] sm:$0xff]
        %v1803 = vld [vmem:[#allocation2 + $0x8] sm:$0xff]
        %v1804 = vld [vmem:[#allocation2 + $0x10] sm:$0xff]
        %v1805 = vld [vmem:[#allocation2 + $0x18] sm:$0xff]
        %v1806 = vld [vmem:[#allocation2 + $0x20] sm:$0xff]
        %v1807 = vld [vmem:[#allocation2 + $0x28] sm:$0xff]
        %v1808 = vld [vmem:[#allocation2 + $0x30] sm:$0xff]
        %v1809 = vld [vmem:[#allocation2 + $0x38] sm:$0xff]
        %v1814 = vunpack.c.l.b16 %v1798
        %v1815 = vunpack.c.l.b16 %v1799
        %v1816 = vunpack.c.l.b16 %v1800
        %v1817 = vunpack.c.l.b16 %v1801
        %v1818 = vpack.c.b16 %v1815, %v1814
        %v1819 = vpack.c.b16 %v1817, %v1816
        %v1821 = vsel %vm669, %v1818, 0
        %v1824 = vsel %vm669, %v1819, 0
        %1826 = vmatprep.subr.bf16.mxu0 %v1803
        %1827 = vmatpush1.bf16.msra.mxu0 %v1802
        %1828 = vmatprep.subr.bf16.mxu0 %v1807
        %1829 = vmatpush1.bf16.msra.mxu0 %v1806
        %1830 = vmatprep.subr.bf16.mxu0 0
        %1831 = vmatpush1.bf16.msra.mxu0 0
        %1832 = vmatprep.subr.bf16.mxu0 0
        %1833 = vmatpush1.bf16.msra.mxu0 0
        %1834 = vmatprep.subr.bf16.mxu0 0
        %1835 = vmatpush1.bf16.msra.mxu0 0
        %1836 = vmatprep.subr.bf16.mxu0 0
        %1837 = vmatpush1.bf16.msra.mxu0 0
        %1838 = vmatprep.subr.bf16.mxu0 0
        %1839 = vmatpush1.bf16.msra.mxu0 0
        %1840 = vmatprep.subr.bf16.mxu0 0
        %1841 = vmatpush1.bf16.msra.mxu0 0
        %1842 = vmatprep.subr.bf16.mxu0 0
        %1843 = vmatpush1.bf16.msra.mxu0 0
        %1844 = vmatprep.subr.bf16.mxu0 0
        %1845 = vmatpush1.bf16.msra.mxu0 0
        %1846 = vmatprep.subr.bf16.mxu0 0
        %1847 = vmatpush1.bf16.msra.mxu0 0
        %1848 = vmatprep.subr.bf16.mxu0 0
        %1849 = vmatpush1.bf16.msra.mxu0 0
        %1850 = vmatprep.subr.bf16.mxu0 0
        %1851 = vmatpush1.bf16.msra.mxu0 0
        %1852 = vmatprep.subr.bf16.mxu0 0
        %1853 = vmatpush1.bf16.msra.mxu0 0
        %1854 = vmatprep.subr.bf16.mxu0 0
        %1855 = vmatpush1.bf16.msra.mxu0 0
        %1856 = vmatprep.subr.bf16.mxu0 0
        %1857 = vmatpush1.bf16.msra.mxu0 0
        %1858 = vmatprep.mubr.bf16.mxu0 0
        %1859 = vmatmul.mubr.bf16.gmra.mrb[0].mxu0 %v1821
        %v1860 = vpop.f32.mrb[0].mxu0
        %v1861 = vadd.f32 0.0, %v1860
        %v1862 = vpop.f32.mrb[0].mxu0
        %v1863 = vadd.f32 0.0, %v1862
        %v1864 = vpop.f32.mrb[0].mxu0
        %v1865 = vadd.f32 0.0, %v1864
        %v1866 = vpop.f32.mrb[0].mxu0
        %v1867 = vadd.f32 0.0, %v1866
        %1868 = vmatprep.mubr.bf16.mxu0 0
        %1869 = vmatmul.mubr.bf16.gmra.mrb[0].mxu0 %v1824
        %v1870 = vpop.f32.mrb[0].mxu0
        %v1871 = vadd.f32 0.0, %v1870
        %v1872 = vpop.f32.mrb[0].mxu0
        %v1873 = vadd.f32 0.0, %v1872
        %v1874 = vpop.f32.mrb[0].mxu0
        %v1875 = vadd.f32 0.0, %v1874
        %v1876 = vpop.f32.mrb[0].mxu0
        %v1877 = vadd.f32 0.0, %v1876
        %1878 = vdwg.mxu0
        %1879 = vmatprep.subr.bf16.mxu0 %v1805
        %1880 = vmatpush1.bf16.msra.mxu0 %v1804
        %1881 = vmatprep.subr.bf16.mxu0 %v1809
        %1882 = vmatpush1.bf16.msra.mxu0 %v1808
        %1883 = vmatprep.subr.bf16.mxu0 0
        %1884 = vmatpush1.bf16.msra.mxu0 0
        %1885 = vmatprep.subr.bf16.mxu0 0
        %1886 = vmatpush1.bf16.msra.mxu0 0
        %1887 = vmatprep.subr.bf16.mxu0 0
        %1888 = vmatpush1.bf16.msra.mxu0 0
        %1889 = vmatprep.subr.bf16.mxu0 0
        %1890 = vmatpush1.bf16.msra.mxu0 0
        %1891 = vmatprep.subr.bf16.mxu0 0
        %1892 = vmatpush1.bf16.msra.mxu0 0
        %1893 = vmatprep.subr.bf16.mxu0 0
        %1894 = vmatpush1.bf16.msra.mxu0 0
        %1895 = vmatprep.subr.bf16.mxu0 0
        %1896 = vmatpush1.bf16.msra.mxu0 0
        %1897 = vmatprep.subr.bf16.mxu0 0
        %1898 = vmatpush1.bf16.msra.mxu0 0
        %1899 = vmatprep.subr.bf16.mxu0 0
        %1900 = vmatpush1.bf16.msra.mxu0 0
        %1901 = vmatprep.subr.bf16.mxu0 0
        %1902 = vmatpush1.bf16.msra.mxu0 0
        %1903 = vmatprep.subr.bf16.mxu0 0
        %1904 = vmatpush1.bf16.msra.mxu0 0
        %1905 = vmatprep.subr.bf16.mxu0 0
        %1906 = vmatpush1.bf16.msra.mxu0 0
        %1907 = vmatprep.subr.bf16.mxu0 0
        %1908 = vmatpush1.bf16.msra.mxu0 0
        %1909 = vmatprep.subr.bf16.mxu0 0
        %1910 = vmatpush1.bf16.msra.mxu0 0
        %1911 = vmatprep.mubr.bf16.mxu0 0
        %1912 = vmatmul.mubr.bf16.gmra.mrb[0].mxu0 %v1821
        %v1913 = vpop.f32.mrb[0].mxu0
        %v1914 = vadd.f32 0.0, %v1913
        %v1915 = vpop.f32.mrb[0].mxu0
        %v1916 = vadd.f32 0.0, %v1915
        %v1917 = vpop.f32.mrb[0].mxu0
        %v1918 = vadd.f32 0.0, %v1917
        %v1919 = vpop.f32.mrb[0].mxu0
        %v1920 = vadd.f32 0.0, %v1919
        %1921 = vmatprep.mubr.bf16.mxu0 0
        %1922 = vmatmul.mubr.bf16.gmra.mrb[0].mxu0 %v1824
        %v1923 = vpop.f32.mrb[0].mxu0
        %v1924 = vadd.f32 0.0, %v1923
        %v1925 = vpop.f32.mrb[0].mxu0
        %v1926 = vadd.f32 0.0, %v1925
        %v1927 = vpop.f32.mrb[0].mxu0
        %v1928 = vadd.f32 0.0, %v1927
        %v1929 = vpop.f32.mrb[0].mxu0
        %v1930 = vadd.f32 0.0, %v1929
        %1931 = vdwg.mxu0
        %v1932 = vpack.c.bf16 %v1865, %v1861
        %v1933 = vpack.c.bf16 %v1867, %v1863
        %v1934 = vpack.c.bf16 %v1918, %v1914
        %v1935 = vpack.c.bf16 %v1920, %v1916
        %v1936 = vpack.c.bf16 %v1875, %v1871
        %v1937 = vpack.c.bf16 %v1877, %v1873
        %v1938 = vpack.c.bf16 %v1928, %v1924
        %v1939 = vpack.c.bf16 %v1930, %v1926
        %v1940 = vmul.bf16 %v1932, 1009007652
        %v1941 = vmul.bf16 %v1933, 1009007652
        %v1942 = vmul.bf16 %v1934, 1009007652
        %v1943 = vmul.bf16 %v1935, 1009007652
        %v1944 = vmul.bf16 %v1936, 1009007652
        %v1945 = vmul.bf16 %v1937, 1009007652
        %v1946 = vmul.bf16 %v1938, 1009007652
        %v1947 = vmul.bf16 %v1939, 1009007652
        %v1948 = vmax.bf16 %v1932, %v1940
        %v1949 = vmax.bf16 %v1933, %v1941
        %v1950 = vmax.bf16 %v1934, %v1942
        %v1951 = vmax.bf16 %v1935, %v1943
        %v1952 = vmax.bf16 %v1936, %v1944
        %v1953 = vmax.bf16 %v1937, %v1945
        %v1954 = vmax.bf16 %v1938, %v1946
        %v1955 = vmax.bf16 %v1939, %v1947
        %v1956 = vld [vmem:[%s6] sm:$0xf]
        %v1958 = vsel %vm669, %v1956, 0
        %1960 = vmatprep.subr.bf16.mxu0 %v1949
        %1961 = vmatpush1.bf16.msra.mxu0 %v1948
        %1962 = vmatprep.subr.bf16.mxu0 %v1953
        %1963 = vmatpush1.bf16.msra.mxu0 %v1952
        %1964 = vmatprep.subr.bf16.mxu0 0
        %1965 = vmatpush1.bf16.msra.mxu0 0
        %1966 = vmatprep.subr.bf16.mxu0 0
        %1967 = vmatpush1.bf16.msra.mxu0 0
        %1968 = vmatprep.subr.bf16.mxu0 0
        %1969 = vmatpush1.bf16.msra.mxu0 0
        %1970 = vmatprep.subr.bf16.mxu0 0
        %1971 = vmatpush1.bf16.msra.mxu0 0
        %1972 = vmatprep.subr.bf16.mxu0 0
        %1973 = vmatpush1.bf16.msra.mxu0 0
        %1974 = vmatprep.subr.bf16.mxu0 0
        %1975 = vmatpush1.bf16.msra.mxu0 0
        %1976 = vmatprep.subr.bf16.mxu0 0
        %1977 = vmatpush1.bf16.msra.mxu0 0
        %1978 = vmatprep.subr.bf16.mxu0 0
        %1979 = vmatpush1.bf16.msra.mxu0 0
        %1980 = vmatprep.subr.bf16.mxu0 0
        %1981 = vmatpush1.bf16.msra.mxu0 0
        %1982 = vmatprep.subr.bf16.mxu0 0
        %1983 = vmatpush1.bf16.msra.mxu0 0
        %1984 = vmatprep.subr.bf16.mxu0 0
        %1985 = vmatpush1.bf16.msra.mxu0 0
        %1986 = vmatprep.subr.bf16.mxu0 0
        %1987 = vmatpush1.bf16.msra.mxu0 0
        %1988 = vmatprep.subr.bf16.mxu0 0
        %1989 = vmatpush1.bf16.msra.mxu0 0
        %1990 = vmatprep.subr.bf16.mxu0 0
        %1991 = vmatpush1.bf16.msra.mxu0 0
        %1992 = vmatprep.mubr.bf16.mxu0 0
        %1993 = vmatmul.mubr.bf16.gmra.mrb[0].mxu0 %v1958
        %v1994 = vpop.f32.mrb[0].mxu0
        %v1995 = vadd.f32 0.0, %v1994
        %v1996 = vpop.f32.mrb[0].mxu0
        %v1997 = vadd.f32 0.0, %v1996
        %v1998 = vpop.f32.mrb[0].mxu0
        %v1999 = vpop.f32.mrb[0].mxu0
        %2000 = vdwg.mxu0
        %2001 = vmatprep.subr.bf16.mxu0 %v1951
        %2002 = vmatpush1.bf16.msra.mxu0 %v1950
        %2003 = vmatprep.subr.bf16.mxu0 %v1955
        %2004 = vmatpush1.bf16.msra.mxu0 %v1954
        %2005 = vmatprep.subr.bf16.mxu0 0
        %2006 = vmatpush1.bf16.msra.mxu0 0
        %2007 = vmatprep.subr.bf16.mxu0 0
        %2008 = vmatpush1.bf16.msra.mxu0 0
        %2009 = vmatprep.subr.bf16.mxu0 0
        %2010 = vmatpush1.bf16.msra.mxu0 0
        %2011 = vmatprep.subr.bf16.mxu0 0
        %2012 = vmatpush1.bf16.msra.mxu0 0
        %2013 = vmatprep.subr.bf16.mxu0 0
        %2014 = vmatpush1.bf16.msra.mxu0 0
        %2015 = vmatprep.subr.bf16.mxu0 0
        %2016 = vmatpush1.bf16.msra.mxu0 0
        %2017 = vmatprep.subr.bf16.mxu0 0
        %2018 = vmatpush1.bf16.msra.mxu0 0
        %2019 = vmatprep.subr.bf16.mxu0 0
        %2020 = vmatpush1.bf16.msra.mxu0 0
        %2021 = vmatprep.subr.bf16.mxu0 0
        %2022 = vmatpush1.bf16.msra.mxu0 0
        %2023 = vmatprep.subr.bf16.mxu0 0
        %2024 = vmatpush1.bf16.msra.mxu0 0
        %2025 = vmatprep.subr.bf16.mxu0 0
        %2026 = vmatpush1.bf16.msra.mxu0 0
        %2027 = vmatprep.subr.bf16.mxu0 0
        %2028 = vmatpush1.bf16.msra.mxu0 0
        %2029 = vmatprep.subr.bf16.mxu0 0
        %2030 = vmatpush1.bf16.msra.mxu0 0
        %2031 = vmatprep.subr.bf16.mxu0 0
        %2032 = vmatpush1.bf16.msra.mxu0 0
        %2033 = vmatprep.mubr.bf16.mxu0 0
        %2034 = vmatmul.mubr.bf16.gmra.mrb[0].mxu0 %v1958
        %v2035 = vpop.f32.mrb[0].mxu0
        %v2036 = vadd.f32 0.0, %v2035
        %v2037 = vpop.f32.mrb[0].mxu0
        %v2038 = vadd.f32 0.0, %v2037
        %v2039 = vpop.f32.mrb[0].mxu0
        %v2040 = vpop.f32.mrb[0].mxu0
        %2041 = vdwg.mxu0
        %v2042 = vmax.f32 %v1995, 0.0
        %v2043 = vmax.f32 %v1997, 0.0
        %v2044 = vmax.f32 %v2036, 0.0
        %v2045 = vmax.f32 %v2038, 0.0
        %v2050 = vcombine.low %v2042, %v2043
        %v2051 = vcombine.low %v2044, %v2045
        %v2053 = vunpack.c.l.s4 1966171168
        %v2054 = vunpack.c.0.s8 %v2053
        %v2055 = vlaneseq
        %v2056 = vshrl.u32 %v2055, 7
        %v2057 = vsub.s32 %v2054, %v2056
        %v2058 = vrot.slane %v2050, %v2057
        %v2060 = vunpack.c.l.s4 1966171168
        %v2061 = vunpack.c.0.s8 %v2060
        %v2062 = vlaneseq
        %v2063 = vshrl.u32 %v2062, 7
        %v2064 = vsub.s32 %v2061, %v2063
        %v2065 = vrot.slane %v2051, %v2064
        %v2066 = vcombine.low %v2058, %v2065
        %v2068 = vunpack.c.l.s4 1966171168
        %v2069 = vunpack.c.0.s8 %v2068
        %v2070 = vlaneseq
        %v2071 = vshrl.u32 %v2070, 7
        %v2072 = vsub.s32 %v2069, %v2071
        %v2073 = vrot.slane %v2066, %v2072
        %v2075 = vlaneseq
        %vm2076 = vcmp.ge.s32.totalorder %v2075, 0
        %vm2077 = vcmp.lt.s32.totalorder %v2075, 512
        %vm2078 = vmand %vm2076, %vm2077
        %2079 = vst.msk [vmem:[%s348] sm:$0xf] %vm2078, %v2073
        %s2080 = sand.u32 %s207, 1
        %s2081 = scalar_lea.sflag [#allocation5], %s2080
        %s2082 = sand.u32 %s207, 1
        %s2083 = smul.addr %s2082, 4
        %s2084 = scalar_lea.vmem [#allocation9], %s2083
        // Predicated region
        $region65: #{tpu_custom_call.1} parent=51 // pred_check
          %p2085 = pneg %p217
        $region66: #{tpu_custom_call.1} parent=51 // pred_check_branch
          %2087 = sbr.rel (%p2085) target = $region68
        $region67: #{tpu_custom_call.1} parent=51 // pred_region
          %s2089 = ssub.s32 64, 64
          %2090 = vsyncadd %s2081, %s2089
          %s2091 = smul.addr %s26, 4
          %s2092 = smul.addr %s2091, 16
          %s2093 = scalar_lea.hbm %s8, %s2092
          %s2095 = sshll.u32 %s2084, 4
          %s2096 = int_to_ptr.vmem [resolvable:$true] %s2095
          %2098 = dma.vmem_to_hbm [thread:$0]  %s2096, 64, %s2093, %s2081
        $region68: #{tpu_custom_call.1} parent=51 // pred_fallthru
          _
      $region52: #{tpu_custom_call.1} parent=5 // pred_fallthru
        _
      %p2099 = scmp.le.s32.totalorder 2, %s21
      // Predicated region
      $region69: #{tpu_custom_call.1} parent=5 // pred_check
        %p2100 = pneg %p2099
      $region70: #{tpu_custom_call.1} parent=5 // pred_check_branch
        %2102 = sbr.rel (%p2100) target = $region72
      $region71: #{tpu_custom_call.1} parent=5 // pred_region
        %s2103 = ssub.s32 %s21, 2
        // Predicated region
        $region73: #{tpu_custom_call.1} parent=71 // pred_check
          %p2104 = pneg %p223
        $region74: #{tpu_custom_call.1} parent=71 // pred_check_branch
          %2106 = sbr.rel (%p2104) target = $region76
        $region75: #{tpu_custom_call.1} parent=71 // pred_region
          %s2107 = sand.u32 %s208, 1
          %s2108 = scalar_lea.sflag [#allocation5], %s2107
          %s2109 = sand.u32 %s208, 1
          %s2110 = smul.addr %s2109, 4
          %s2111 = scalar_lea.vmem [#allocation9], %s2110
          %2112 = dma.done %s2108, 64
        $region76: #{tpu_custom_call.1} parent=71 // pred_fallthru
          _
      $region72: #{tpu_custom_call.1} parent=5 // pred_fallthru
        _
    $region6: #{tpu_custom_call.1} parent=1 // loop_footer
      %s25 = sadd.s32 1, %s21
    $region7: #{tpu_custom_call.1} parent=1 // loop_footer_branch
      %20 = sbr.rel target = $region3
    $region8: #{tpu_custom_call.1} parent=1 // loop_exit
      _
    %2113 = vsyncpa [#allocation4], 1
    %s2114 = scalar_lea.sflag [#allocation4], 1
    %2115 = vsyncpa %s2114, 1
    %2116 = vsyncpa [#allocation7], 1
    %2117 = vsyncpa [#allocation5], 1
    %s2118 = scalar_lea.sflag [#allocation5], 1
    %2119 = vsyncpa %s2118, 1

</llo_original>
